<compile_context>
chip_gen: v6e
topology: v6e:2x2x1
jax: 0.10.0
libtpu: 0.0.40
codegen_flags: <defaults>
</compile_context>

<pallas_src>
import jax
import jax.numpy as jnp
from jax.experimental import pallas as pl
from jax.experimental.pallas import tpu as pltpu

D_MODEL = 256
D_FF = 1024


def ffn_kernel(x_ref, w1_ref, b1_ref, w2_ref, b2_ref, o_ref):
    # Hoist bias casts/broadcast sources once (JAX does not CSE broadcast_in_dim).
    b1 = b1_ref[...].astype(jnp.float32)   # (1, d_ff)
    b2 = b2_ref[...].astype(jnp.float32)   # (1, d_model)

    x = x_ref[...]                          # (tile_rows, d_model), native dtype -> MXU
    # Linear(d_model, d_ff) with f32 accumulation
    h = jnp.dot(x, w1_ref[...], preferred_element_type=jnp.float32) + b1
    # ReLU (Dropout is identity at inference)
    h = jnp.maximum(h, 0.0)
    # Linear(d_ff, d_model) with f32 accumulation
    y = jnp.dot(h.astype(w2_ref.dtype), w2_ref[...],
                preferred_element_type=jnp.float32) + b2
    o_ref[...] = y.astype(o_ref.dtype)


def position_wise_ffn(x, w1, b1, w2, b2, *, tile_rows=512):
    """x: (B, S, d_model). Returns ReLU(x @ w1 + b1) @ w2 + b2, same shape/dtype as x."""
    B, S, D = x.shape
    d_ff = w1.shape[1]
    rows = B * S

    # Clamp the row tile to the (8-aligned) padded row count, then pad rows so the
    # grid divides evenly. Padding rows are zeros and sliced off at the end.
    tile_rows = max(8, min(tile_rows, pl.cdiv(rows, 8) * 8))
    rows_padded = pl.cdiv(rows, tile_rows) * tile_rows

    x2 = x.reshape(rows, D)
    if rows_padded != rows:
        x2 = jnp.pad(x2, ((0, rows_padded - rows), (0, 0)))

    b1_2 = b1.reshape(1, d_ff)
    b2_2 = b2.reshape(1, D)

    grid = (rows_padded // tile_rows,)

    out = pl.pallas_call(
        ffn_kernel,
        out_shape=jax.ShapeDtypeStruct((rows_padded, D), x.dtype),
        grid_spec=pltpu.PrefetchScalarGridSpec(
            num_scalar_prefetch=0,
            grid=grid,
            in_specs=[
                pl.BlockSpec((tile_rows, D), lambda i: (i, 0)),   # x tile
                pl.BlockSpec((D, d_ff), lambda i: (0, 0)),        # W1 (resident)
                pl.BlockSpec((1, d_ff), lambda i: (0, 0)),        # b1 (resident)
                pl.BlockSpec((d_ff, D), lambda i: (0, 0)),        # W2 (resident)
                pl.BlockSpec((1, D), lambda i: (0, 0)),           # b2 (resident)
            ],
            out_specs=pl.BlockSpec((tile_rows, D), lambda i: (i, 0)),
        ),
        compiler_params=pltpu.CompilerParams(
            dimension_semantics=("parallel",),
        ),
    )(x2, w1, b1_2, w2, b2_2)

    return out[:rows].reshape(B, S, D)


def position_wise_ffn_ref(x, w1, b1, w2, b2):
    h = jnp.maximum(jnp.einsum("bsd,df->bsf", x, w1) + b1, 0.0)
    return jnp.einsum("bsf,fd->bsd", h, w2) + b2


if __name__ == "__main__":
    key = jax.random.PRNGKey(0)
    k_x, k_w1, k_b1, k_w2, k_b2 = jax.random.split(key, 5)

    B, S = 2, 8
    x = jax.random.normal(k_x, (B, S, D_MODEL), dtype=jnp.float32)

    # Deterministic synthetic parameters (not a checkpoint load).
    w1 = jax.random.normal(k_w1, (D_MODEL, D_FF), dtype=jnp.float32) * 0.02
    b1 = jax.random.normal(k_b1, (D_FF,), dtype=jnp.float32) * 0.01
    w2 = jax.random.normal(k_w2, (D_FF, D_MODEL), dtype=jnp.float32) * 0.02
    b2 = jax.random.normal(k_b2, (D_MODEL,), dtype=jnp.float32) * 0.01

    out = position_wise_ffn(x, w1, b1, w2, b2)
    out = jax.block_until_ready(out)

    ref = position_wise_ffn_ref(x, w1, b1, w2, b2)
    assert out.shape == (B, S, D_MODEL)
    assert jnp.allclose(out, ref, atol=1e-4, rtol=1e-4), "mismatch vs reference"

    print("KERNEL_OK")
</pallas_src>

<mosaic_0001>
module attributes {stable_mosaic.version = 11 : i64} {
  func.func @ffn_kernel(%arg0: i32, %arg1: memref<16x256xf32, #tpu.memory_space<vmem>>, %arg2: memref<256x1024xf32, #tpu.memory_space<vmem>>, %arg3: memref<1x1024xf32, #tpu.memory_space<vmem>>, %arg4: memref<1024x256xf32, #tpu.memory_space<vmem>>, %arg5: memref<1x256xf32, #tpu.memory_space<vmem>>, %arg6: memref<16x256xf32, #tpu.memory_space<vmem>>) attributes {dimension_semantics = [#tpu.dimension_semantics<parallel>], iteration_bounds = array<i64: 1>, scalar_prefetch = 0 : i64, scratch_operands = 0 : i64, tpu.core_type = #tpu.core_type<tc>, window_params = [{transform_indices = @transform_0, window_bounds = array<i64: 16, 256>}, {pipeline_mode = #tpu.pipeline_mode<synchronous>, transform_indices = @transform_1, window_bounds = array<i64: 256, 1024>}, {pipeline_mode = #tpu.pipeline_mode<synchronous>, transform_indices = @transform_2, window_bounds = array<i64: 1, 1024>}, {pipeline_mode = #tpu.pipeline_mode<synchronous>, transform_indices = @transform_3, window_bounds = array<i64: 1024, 256>}, {pipeline_mode = #tpu.pipeline_mode<synchronous>, transform_indices = @transform_4, window_bounds = array<i64: 1, 256>}, {transform_indices = @transform_5, window_bounds = array<i64: 16, 256>}]} {
    %c0 = arith.constant 0 : index
    %c0_0 = arith.constant 0 : index
    %0 = vector.load %arg3[%c0, %c0_0] : memref<1x1024xf32, #tpu.memory_space<vmem>>, vector<1x1024xf32>
    %c0_1 = arith.constant 0 : index
    %c0_2 = arith.constant 0 : index
    %1 = vector.load %arg5[%c0_1, %c0_2] : memref<1x256xf32, #tpu.memory_space<vmem>>, vector<1x256xf32>
    %c0_3 = arith.constant 0 : index
    %c0_4 = arith.constant 0 : index
    %2 = vector.load %arg1[%c0_3, %c0_4] : memref<16x256xf32, #tpu.memory_space<vmem>>, vector<16x256xf32>
    %c0_5 = arith.constant 0 : index
    %c0_6 = arith.constant 0 : index
    %3 = vector.load %arg2[%c0_5, %c0_6] : memref<256x1024xf32, #tpu.memory_space<vmem>>, vector<256x1024xf32>
    %cst = arith.constant dense<0.000000e+00> : vector<16x1024xf32>
    %4 = tpu.matmul %2, %3, %cst {dimension_numbers = #tpu.dot_dimension_numbers<[1], [0], [0], [1], [0, 0, 1, 1], [], []>} : vector<16x256xf32>, vector<256x1024xf32>, vector<16x1024xf32> -> vector<16x1024xf32>
    %5 = vector.broadcast %0 : vector<1x1024xf32> to vector<16x1024xf32>
    %6 = arith.addf %4, %5 : vector<16x1024xf32>
    %cst_7 = arith.constant 0.000000e+00 : f32
    %7 = vector.broadcast %cst_7 : f32 to vector<16x1024xf32>
    %8 = arith.maximumf %6, %7 : vector<16x1024xf32>
    %c0_8 = arith.constant 0 : index
    %c0_9 = arith.constant 0 : index
    %9 = vector.load %arg4[%c0_8, %c0_9] : memref<1024x256xf32, #tpu.memory_space<vmem>>, vector<1024x256xf32>
    %cst_10 = arith.constant dense<0.000000e+00> : vector<16x256xf32>
    %10 = tpu.matmul %8, %9, %cst_10 {dimension_numbers = #tpu.dot_dimension_numbers<[1], [0], [0], [1], [0, 0, 1, 1], [], []>} : vector<16x1024xf32>, vector<1024x256xf32>, vector<16x256xf32> -> vector<16x256xf32>
    %11 = vector.broadcast %1 : vector<1x256xf32> to vector<16x256xf32>
    %12 = arith.addf %10, %11 : vector<16x256xf32>
    %c0_11 = arith.constant 0 : index
    %c0_12 = arith.constant 0 : index
    %13 = vector.load %arg6[%c0_11, %c0_12] : memref<16x256xf32, #tpu.memory_space<vmem>>, vector<16x256xf32>
    tpu.vector_store %arg6[%c0_11, %c0_12], %12 {strides = array<i32>} : memref<16x256xf32, #tpu.memory_space<vmem>>, vector<16x256xf32>,
    return
  }
  func.func @transform_0(%arg0: i32) -> (i32, i32) {
    %c0_i32 = arith.constant 0 : i32
    %c0_i32_0 = arith.constant 0 : i32
    return %arg0, %c0_i32 : i32, i32
  }
  func.func @transform_1(%arg0: i32) -> (i32, i32) {
    %c0_i32 = arith.constant 0 : i32
    %c0_i32_0 = arith.constant 0 : i32
    %c0_i32_1 = arith.constant 0 : i32
    return %c0_i32, %c0_i32_0 : i32, i32
  }
  func.func @transform_2(%arg0: i32) -> (i32, i32) {
    %c0_i32 = arith.constant 0 : i32
    %c0_i32_0 = arith.constant 0 : i32
    %c0_i32_1 = arith.constant 0 : i32
    return %c0_i32, %c0_i32_0 : i32, i32
  }
  func.func @transform_3(%arg0: i32) -> (i32, i32) {
    %c0_i32 = arith.constant 0 : i32
    %c0_i32_0 = arith.constant 0 : i32
    %c0_i32_1 = arith.constant 0 : i32
    return %c0_i32, %c0_i32_0 : i32, i32
  }
  func.func @transform_4(%arg0: i32) -> (i32, i32) {
    %c0_i32 = arith.constant 0 : i32
    %c0_i32_0 = arith.constant 0 : i32
    %c0_i32_1 = arith.constant 0 : i32
    return %c0_i32, %c0_i32_0 : i32, i32
  }
  func.func @transform_5(%arg0: i32) -> (i32, i32) {
    %c0_i32 = arith.constant 0 : i32
    %c0_i32_0 = arith.constant 0 : i32
    return %arg0, %c0_i32 : i32, i32
  }
}

</mosaic_0001>

<llo_original>
// kernel: tpu_custom_call.1
$region0: #{tpu_custom_call.1}
  #allocation0 [shape = 'u32[]', space=smem, size = 0x4, offset = 0x4, fixed_abs, tag = 'smem constant byte address 0x4 - core index']
  #allocation1 [shape = 'u32[144,128]{1,0:T(1,128)}', space=vmem, size = 0x12000, scoped, tag = 'internal scratch']
  %s0 = inlined_call_operand.hbm [shape: f32[16,256], index: 0, kind: input, shape index: {}]
  %s1 = inlined_call_operand.hbm [shape: f32[256,1024], index: 1, kind: input, shape index: {}]
  %s2 = inlined_call_operand.hbm [shape: f32[1,1024], index: 2, kind: input, shape index: {}]
  %s3 = inlined_call_operand.hbm [shape: f32[1024,256], index: 3, kind: input, shape index: {}]
  %s4 = inlined_call_operand.vmem [shape: f32[1,256], index: 4, kind: input, shape index: {}]
  %s5 = inlined_call_operand.hbm [shape: f32[16,256], index: 5, kind: output, shape index: {}]
  %s6 = sld [smem:[#allocation0]]
  $region46: #{tpu_custom_call.1} parent=0
    _
  %s8 = ssub.s32 1, %s6
  %s9 = scalar_select 0, %s8, %s6
  $region1: #{tpu_custom_call.1} parent=0
    #allocation2 [shape = 'u8[16384]{0}', space=vmem, size = 0x4000, scoped, tag = 'input window, operand 0, single buffered']
    #allocation3 [shape = 's32[1]{0}', space=sflag, size = 0x4, scoped, tag = 'scoped memory for tpu_custom_call.1']
    #allocation4 [shape = 's32[1]{0}', space=sflag, size = 0x4, scoped, tag = 'scoped memory for tpu_custom_call.1']
    #allocation5 [shape = 'u8[1048576]{0}', space=vmem, size = 0x100000, scoped, tag = 'input window, operand 1, single buffered']
    #allocation6 [shape = 's32[1]{0}', space=sflag, size = 0x4, scoped, tag = 'scoped memory for tpu_custom_call.1']
    #allocation7 [shape = 'u8[4096]{0}', space=vmem, size = 0x1000, scoped, tag = 'input window, operand 2, single buffered']
    #allocation8 [shape = 'u8[1048576]{0}', space=vmem, size = 0x100000, scoped, tag = 'input window, operand 3, single buffered']
    #allocation9 [shape = 's32[1]{0}', space=sflag, size = 0x4, scoped, tag = 'scoped memory for tpu_custom_call.1']
    #allocation10 [shape = 'u8[16384]{0}', space=vmem, size = 0x4000, scoped, tag = 'output window, operand 0, single buffered']
    %10 = vsyncpa [#allocation3], 0
    %11 = vsyncpa [#allocation6], 0
    %12 = vsyncpa [#allocation9], 0
    %13 = vsyncpa [#allocation4], 0
    // Predicated region
    $region2: #{tpu_custom_call.1} parent=1 // pred_check
      _
    $region3: #{tpu_custom_call.1} parent=1 // pred_check_branch
      %15 = sbr.rel (0) target = $region5
    $region4: #{tpu_custom_call.1} parent=1 // pred_region
      %s17 = ssub.s32 512, 512
      %18 = vsyncadd [#allocation3], %s17
      %s19 = sshll.u32 [#allocation2], 4
      %s20 = int_to_ptr.vmem [resolvable:$true] %s19
      %25 = dma.hbm_to_vmem [thread:$0]  %s0, 512, %s20, [#allocation3], 256, 256, 16
    $region5: #{tpu_custom_call.1} parent=1 // pred_fallthru
      _
    // Predicated region
    $region6: #{tpu_custom_call.1} parent=1 // pred_check
      _
    $region7: #{tpu_custom_call.1} parent=1 // pred_check_branch
      %27 = sbr.rel (0) target = $region9
    $region8: #{tpu_custom_call.1} parent=1 // pred_region
      %s29 = ssub.s32 32768, 32768
      %30 = vsyncadd [#allocation6], %s29
      %s31 = sshll.u32 [#allocation5], 4
      %s32 = int_to_ptr.vmem [resolvable:$true] %s31
      %37 = dma.hbm_to_vmem [thread:$0]  %s1, 32768, %s32, [#allocation6], 1024, 1024, 64
    $region9: #{tpu_custom_call.1} parent=1 // pred_fallthru
      _
    // Predicated region
    $region10: #{tpu_custom_call.1} parent=1 // pred_check
      _
    $region11: #{tpu_custom_call.1} parent=1 // pred_check_branch
      %39 = sbr.rel (0) target = $region13
    $region12: #{tpu_custom_call.1} parent=1 // pred_region
      %s41 = ssub.s32 128, 128
      %42 = vsyncadd [#allocation6], %s41
      %s44 = sshll.u32 [#allocation7], 4
      %s45 = int_to_ptr.vmem [resolvable:$true] %s44
      %47 = dma.hbm_to_vmem [thread:$0]  %s2, 128, %s45, [#allocation6]
    $region13: #{tpu_custom_call.1} parent=1 // pred_fallthru
      _
    // Predicated region
    $region14: #{tpu_custom_call.1} parent=1 // pred_check
      _
    $region15: #{tpu_custom_call.1} parent=1 // pred_check_branch
      %49 = sbr.rel (0) target = $region17
    $region16: #{tpu_custom_call.1} parent=1 // pred_region
      %s51 = ssub.s32 32768, 32768
      %52 = vsyncadd [#allocation9], %s51
      %s53 = sshll.u32 [#allocation8], 4
      %s54 = int_to_ptr.vmem [resolvable:$true] %s53
      %59 = dma.hbm_to_vmem [thread:$0]  %s3, 32768, %s54, [#allocation9], 256, 256, 16
    $region17: #{tpu_custom_call.1} parent=1 // pred_fallthru
      _
    // Predicated region
    $region18: #{tpu_custom_call.1} parent=1 // pred_check
      _
    $region19: #{tpu_custom_call.1} parent=1 // pred_check_branch
      %61 = sbr.rel (0) target = $region21
    $region20: #{tpu_custom_call.1} parent=1 // pred_region
      _
    $region21: #{tpu_custom_call.1} parent=1 // pred_fallthru
      _
    // Predicated region
    $region22: #{tpu_custom_call.1} parent=1 // pred_check
      _
    $region23: #{tpu_custom_call.1} parent=1 // pred_check_branch
      %63 = sbr.rel (0) target = $region25
    $region24: #{tpu_custom_call.1} parent=1 // pred_region
      %64 = dma.done [#allocation3], 512
    $region25: #{tpu_custom_call.1} parent=1 // pred_fallthru
      _
    // Predicated region
    $region26: #{tpu_custom_call.1} parent=1 // pred_check
      _
    $region27: #{tpu_custom_call.1} parent=1 // pred_check_branch
      %66 = sbr.rel (0) target = $region29
    $region28: #{tpu_custom_call.1} parent=1 // pred_region
      %67 = dma.done [#allocation6], 32768
    $region29: #{tpu_custom_call.1} parent=1 // pred_fallthru
      _
    // Predicated region
    $region30: #{tpu_custom_call.1} parent=1 // pred_check
      _
    $region31: #{tpu_custom_call.1} parent=1 // pred_check_branch
      %69 = sbr.rel (0) target = $region33
    $region32: #{tpu_custom_call.1} parent=1 // pred_region
      %70 = dma.done [#allocation6], 128
    $region33: #{tpu_custom_call.1} parent=1 // pred_fallthru
      _
    // Predicated region
    $region34: #{tpu_custom_call.1} parent=1 // pred_check
      _
    $region35: #{tpu_custom_call.1} parent=1 // pred_check_branch
      %72 = sbr.rel (0) target = $region37
    $region36: #{tpu_custom_call.1} parent=1 // pred_region
      %73 = dma.done [#allocation9], 32768
    $region37: #{tpu_custom_call.1} parent=1 // pred_fallthru
      _
    %v74 = vld [vmem:[#allocation7] sm:$0xff]
    %v75 = vld [vmem:[%s4] sm:$0x3]
    %v76 = vld [vmem:[#allocation2] sm:$0xff]
    %v77 = vld [vmem:[#allocation2 + $0x8] sm:$0xff]
    %v78 = vld [vmem:[#allocation2 + $0x10] sm:$0xff]
    %v79 = vld [vmem:[#allocation2 + $0x18] sm:$0xff]
    %v80 = vld [vmem:[#allocation5] sm:$0xff]
    %v81 = vld [vmem:[#allocation5 + $0x8] sm:$0xff]
    %v82 = vld [vmem:[#allocation5 + $0x10] sm:$0xff]
    %v83 = vld [vmem:[#allocation5 + $0x18] sm:$0xff]
    %v84 = vld [vmem:[#allocation5 + $0x20] sm:$0xff]
    %v85 = vld [vmem:[#allocation5 + $0x28] sm:$0xff]
    %v86 = vld [vmem:[#allocation5 + $0x30] sm:$0xff]
    %v87 = vld [vmem:[#allocation5 + $0x38] sm:$0xff]
    %v88 = vld [vmem:[#allocation5 + $0x40] sm:$0xff]
    %v89 = vld [vmem:[#allocation5 + $0x48] sm:$0xff]
    %v90 = vld [vmem:[#allocation5 + $0x50] sm:$0xff]
    %v91 = vld [vmem:[#allocation5 + $0x58] sm:$0xff]
    %v92 = vld [vmem:[#allocation5 + $0x60] sm:$0xff]
    %v93 = vld [vmem:[#allocation5 + $0x68] sm:$0xff]
    %v94 = vld [vmem:[#allocation5 + $0x70] sm:$0xff]
    %v95 = vld [vmem:[#allocation5 + $0x78] sm:$0xff]
    %v96 = vld [vmem:[#allocation5 + $0x80] sm:$0xff]
    %v97 = vld [vmem:[#allocation5 + $0x88] sm:$0xff]
    %v98 = vld [vmem:[#allocation5 + $0x90] sm:$0xff]
    %v99 = vld [vmem:[#allocation5 + $0x98] sm:$0xff]
    %v100 = vld [vmem:[#allocation5 + $0xa0] sm:$0xff]
    %v101 = vld [vmem:[#allocation5 + $0xa8] sm:$0xff]
    %v102 = vld [vmem:[#allocation5 + $0xb0] sm:$0xff]
    %v103 = vld [vmem:[#allocation5 + $0xb8] sm:$0xff]
    %v104 = vld [vmem:[#allocation5 + $0xc0] sm:$0xff]
    %v105 = vld [vmem:[#allocation5 + $0xc8] sm:$0xff]
    %v106 = vld [vmem:[#allocation5 + $0xd0] sm:$0xff]
    %v107 = vld [vmem:[#allocation5 + $0xd8] sm:$0xff]
    %v108 = vld [vmem:[#allocation5 + $0xe0] sm:$0xff]
    %v109 = vld [vmem:[#allocation5 + $0xe8] sm:$0xff]
    %v110 = vld [vmem:[#allocation5 + $0xf0] sm:$0xff]
    %v111 = vld [vmem:[#allocation5 + $0xf8] sm:$0xff]
    %v112 = vld [vmem:[#allocation5 + $0x100] sm:$0xff]
    %v113 = vld [vmem:[#allocation5 + $0x108] sm:$0xff]
    %v114 = vld [vmem:[#allocation5 + $0x110] sm:$0xff]
    %v115 = vld [vmem:[#allocation5 + $0x118] sm:$0xff]
    %v116 = vld [vmem:[#allocation5 + $0x120] sm:$0xff]
    %v117 = vld [vmem:[#allocation5 + $0x128] sm:$0xff]
    %v118 = vld [vmem:[#allocation5 + $0x130] sm:$0xff]
    %v119 = vld [vmem:[#allocation5 + $0x138] sm:$0xff]
    %v120 = vld [vmem:[#allocation5 + $0x140] sm:$0xff]
    %v121 = vld [vmem:[#allocation5 + $0x148] sm:$0xff]
    %v122 = vld [vmem:[#allocation5 + $0x150] sm:$0xff]
    %v123 = vld [vmem:[#allocation5 + $0x158] sm:$0xff]
    %v124 = vld [vmem:[#allocation5 + $0x160] sm:$0xff]
    %v125 = vld [vmem:[#allocation5 + $0x168] sm:$0xff]
    %v126 = vld [vmem:[#allocation5 + $0x170] sm:$0xff]
    %v127 = vld [vmem:[#allocation5 + $0x178] sm:$0xff]
    %v128 = vld [vmem:[#allocation5 + $0x180] sm:$0xff]
    %v129 = vld [vmem:[#allocation5 + $0x188] sm:$0xff]
    %v130 = vld [vmem:[#allocation5 + $0x190] sm:$0xff]
    %v131 = vld [vmem:[#allocation5 + $0x198] sm:$0xff]
    %v132 = vld [vmem:[#allocation5 + $0x1a0] sm:$0xff]
    %v133 = vld [vmem:[#allocation5 + $0x1a8] sm:$0xff]
    %v134 = vld [vmem:[#allocation5 + $0x1b0] sm:$0xff]
    %v135 = vld [vmem:[#allocation5 + $0x1b8] sm:$0xff]
    %v136 = vld [vmem:[#allocation5 + $0x1c0] sm:$0xff]
    %v137 = vld [vmem:[#allocation5 + $0x1c8] sm:$0xff]
    %v138 = vld [vmem:[#allocation5 + $0x1d0] sm:$0xff]
    %v139 = vld [vmem:[#allocation5 + $0x1d8] sm:$0xff]
    %v140 = vld [vmem:[#allocation5 + $0x1e0] sm:$0xff]
    %v141 = vld [vmem:[#allocation5 + $0x1e8] sm:$0xff]
    %v142 = vld [vmem:[#allocation5 + $0x1f0] sm:$0xff]
    %v143 = vld [vmem:[#allocation5 + $0x1f8] sm:$0xff]
    %v144 = vld [vmem:[#allocation5 + $0x200] sm:$0xff]
    %v145 = vld [vmem:[#allocation5 + $0x208] sm:$0xff]
    %v146 = vld [vmem:[#allocation5 + $0x210] sm:$0xff]
    %v147 = vld [vmem:[#allocation5 + $0x218] sm:$0xff]
    %v148 = vld [vmem:[#allocation5 + $0x220] sm:$0xff]
    %v149 = vld [vmem:[#allocation5 + $0x228] sm:$0xff]
    %v150 = vld [vmem:[#allocation5 + $0x230] sm:$0xff]
    %v151 = vld [vmem:[#allocation5 + $0x238] sm:$0xff]
    %v152 = vld [vmem:[#allocation5 + $0x240] sm:$0xff]
    %v153 = vld [vmem:[#allocation5 + $0x248] sm:$0xff]
    %v154 = vld [vmem:[#allocation5 + $0x250] sm:$0xff]
    %v155 = vld [vmem:[#allocation5 + $0x258] sm:$0xff]
    %v156 = vld [vmem:[#allocation5 + $0x260] sm:$0xff]
    %v157 = vld [vmem:[#allocation5 + $0x268] sm:$0xff]
    %v158 = vld [vmem:[#allocation5 + $0x270] sm:$0xff]
    %v159 = vld [vmem:[#allocation5 + $0x278] sm:$0xff]
    %v160 = vld [vmem:[#allocation5 + $0x280] sm:$0xff]
    %v161 = vld [vmem:[#allocation5 + $0x288] sm:$0xff]
    %v162 = vld [vmem:[#allocation5 + $0x290] sm:$0xff]
    %v163 = vld [vmem:[#allocation5 + $0x298] sm:$0xff]
    %v164 = vld [vmem:[#allocation5 + $0x2a0] sm:$0xff]
    %v165 = vld [vmem:[#allocation5 + $0x2a8] sm:$0xff]
    %v166 = vld [vmem:[#allocation5 + $0x2b0] sm:$0xff]
    %v167 = vld [vmem:[#allocation5 + $0x2b8] sm:$0xff]
    %v168 = vld [vmem:[#allocation5 + $0x2c0] sm:$0xff]
    %v169 = vld [vmem:[#allocation5 + $0x2c8] sm:$0xff]
    %v170 = vld [vmem:[#allocation5 + $0x2d0] sm:$0xff]
    %v171 = vld [vmem:[#allocation5 + $0x2d8] sm:$0xff]
    %v172 = vld [vmem:[#allocation5 + $0x2e0] sm:$0xff]
    %v173 = vld [vmem:[#allocation5 + $0x2e8] sm:$0xff]
    %v174 = vld [vmem:[#allocation5 + $0x2f0] sm:$0xff]
    %v175 = vld [vmem:[#allocation5 + $0x2f8] sm:$0xff]
    %v176 = vld [vmem:[#allocation5 + $0x300] sm:$0xff]
    %v177 = vld [vmem:[#allocation5 + $0x308] sm:$0xff]
    %v178 = vld [vmem:[#allocation5 + $0x310] sm:$0xff]
    %v179 = vld [vmem:[#allocation5 + $0x318] sm:$0xff]
    %v180 = vld [vmem:[#allocation5 + $0x320] sm:$0xff]
    %v181 = vld [vmem:[#allocation5 + $0x328] sm:$0xff]
    %v182 = vld [vmem:[#allocation5 + $0x330] sm:$0xff]
    %v183 = vld [vmem:[#allocation5 + $0x338] sm:$0xff]
    %v184 = vld [vmem:[#allocation5 + $0x340] sm:$0xff]
    %v185 = vld [vmem:[#allocation5 + $0x348] sm:$0xff]
    %v186 = vld [vmem:[#allocation5 + $0x350] sm:$0xff]
    %v187 = vld [vmem:[#allocation5 + $0x358] sm:$0xff]
    %v188 = vld [vmem:[#allocation5 + $0x360] sm:$0xff]
    %v189 = vld [vmem:[#allocation5 + $0x368] sm:$0xff]
    %v190 = vld [vmem:[#allocation5 + $0x370] sm:$0xff]
    %v191 = vld [vmem:[#allocation5 + $0x378] sm:$0xff]
    %v192 = vld [vmem:[#allocation5 + $0x380] sm:$0xff]
    %v193 = vld [vmem:[#allocation5 + $0x388] sm:$0xff]
    %v194 = vld [vmem:[#allocation5 + $0x390] sm:$0xff]
    %v195 = vld [vmem:[#allocation5 + $0x398] sm:$0xff]
    %v196 = vld [vmem:[#allocation5 + $0x3a0] sm:$0xff]
    %v197 = vld [vmem:[#allocation5 + $0x3a8] sm:$0xff]
    %v198 = vld [vmem:[#allocation5 + $0x3b0] sm:$0xff]
    %v199 = vld [vmem:[#allocation5 + $0x3b8] sm:$0xff]
    %v200 = vld [vmem:[#allocation5 + $0x3c0] sm:$0xff]
    %v201 = vld [vmem:[#allocation5 + $0x3c8] sm:$0xff]
    %v202 = vld [vmem:[#allocation5 + $0x3d0] sm:$0xff]
    %v203 = vld [vmem:[#allocation5 + $0x3d8] sm:$0xff]
    %v204 = vld [vmem:[#allocation5 + $0x3e0] sm:$0xff]
    %v205 = vld [vmem:[#allocation5 + $0x3e8] sm:$0xff]
    %v206 = vld [vmem:[#allocation5 + $0x3f0] sm:$0xff]
    %v207 = vld [vmem:[#allocation5 + $0x3f8] sm:$0xff]
    %v208 = vld [vmem:[#allocation5 + $0x400] sm:$0xff]
    %v209 = vld [vmem:[#allocation5 + $0x408] sm:$0xff]
    %v210 = vld [vmem:[#allocation5 + $0x410] sm:$0xff]
    %v211 = vld [vmem:[#allocation5 + $0x418] sm:$0xff]
    %v212 = vld [vmem:[#allocation5 + $0x420] sm:$0xff]
    %v213 = vld [vmem:[#allocation5 + $0x428] sm:$0xff]
    %v214 = vld [vmem:[#allocation5 + $0x430] sm:$0xff]
    %v215 = vld [vmem:[#allocation5 + $0x438] sm:$0xff]
    %v216 = vld [vmem:[#allocation5 + $0x440] sm:$0xff]
    %v217 = vld [vmem:[#allocation5 + $0x448] sm:$0xff]
    %v218 = vld [vmem:[#allocation5 + $0x450] sm:$0xff]
    %v219 = vld [vmem:[#allocation5 + $0x458] sm:$0xff]
    %v220 = vld [vmem:[#allocation5 + $0x460] sm:$0xff]
    %v221 = vld [vmem:[#allocation5 + $0x468] sm:$0xff]
    %v222 = vld [vmem:[#allocation5 + $0x470] sm:$0xff]
    %v223 = vld [vmem:[#allocation5 + $0x478] sm:$0xff]
    %v224 = vld [vmem:[#allocation5 + $0x480] sm:$0xff]
    %v225 = vld [vmem:[#allocation5 + $0x488] sm:$0xff]
    %v226 = vld [vmem:[#allocation5 + $0x490] sm:$0xff]
    %v227 = vld [vmem:[#allocation5 + $0x498] sm:$0xff]
    %v228 = vld [vmem:[#allocation5 + $0x4a0] sm:$0xff]
    %v229 = vld [vmem:[#allocation5 + $0x4a8] sm:$0xff]
    %v230 = vld [vmem:[#allocation5 + $0x4b0] sm:$0xff]
    %v231 = vld [vmem:[#allocation5 + $0x4b8] sm:$0xff]
    %v232 = vld [vmem:[#allocation5 + $0x4c0] sm:$0xff]
    %v233 = vld [vmem:[#allocation5 + $0x4c8] sm:$0xff]
    %v234 = vld [vmem:[#allocation5 + $0x4d0] sm:$0xff]
    %v235 = vld [vmem:[#allocation5 + $0x4d8] sm:$0xff]
    %v236 = vld [vmem:[#allocation5 + $0x4e0] sm:$0xff]
    %v237 = vld [vmem:[#allocation5 + $0x4e8] sm:$0xff]
    %v238 = vld [vmem:[#allocation5 + $0x4f0] sm:$0xff]
    %v239 = vld [vmem:[#allocation5 + $0x4f8] sm:$0xff]
    %v240 = vld [vmem:[#allocation5 + $0x500] sm:$0xff]
    %v241 = vld [vmem:[#allocation5 + $0x508] sm:$0xff]
    %v242 = vld [vmem:[#allocation5 + $0x510] sm:$0xff]
    %v243 = vld [vmem:[#allocation5 + $0x518] sm:$0xff]
    %v244 = vld [vmem:[#allocation5 + $0x520] sm:$0xff]
    %v245 = vld [vmem:[#allocation5 + $0x528] sm:$0xff]
    %v246 = vld [vmem:[#allocation5 + $0x530] sm:$0xff]
    %v247 = vld [vmem:[#allocation5 + $0x538] sm:$0xff]
    %v248 = vld [vmem:[#allocation5 + $0x540] sm:$0xff]
    %v249 = vld [vmem:[#allocation5 + $0x548] sm:$0xff]
    %v250 = vld [vmem:[#allocation5 + $0x550] sm:$0xff]
    %v251 = vld [vmem:[#allocation5 + $0x558] sm:$0xff]
    %v252 = vld [vmem:[#allocation5 + $0x560] sm:$0xff]
    %v253 = vld [vmem:[#allocation5 + $0x568] sm:$0xff]
    %v254 = vld [vmem:[#allocation5 + $0x570] sm:$0xff]
    %v255 = vld [vmem:[#allocation5 + $0x578] sm:$0xff]
    %v256 = vld [vmem:[#allocation5 + $0x580] sm:$0xff]
    %v257 = vld [vmem:[#allocation5 + $0x588] sm:$0xff]
    %v258 = vld [vmem:[#allocation5 + $0x590] sm:$0xff]
    %v259 = vld [vmem:[#allocation5 + $0x598] sm:$0xff]
    %v260 = vld [vmem:[#allocation5 + $0x5a0] sm:$0xff]
    %v261 = vld [vmem:[#allocation5 + $0x5a8] sm:$0xff]
    %v262 = vld [vmem:[#allocation5 + $0x5b0] sm:$0xff]
    %v263 = vld [vmem:[#allocation5 + $0x5b8] sm:$0xff]
    %v264 = vld [vmem:[#allocation5 + $0x5c0] sm:$0xff]
    %v265 = vld [vmem:[#allocation5 + $0x5c8] sm:$0xff]
    %v266 = vld [vmem:[#allocation5 + $0x5d0] sm:$0xff]
    %v267 = vld [vmem:[#allocation5 + $0x5d8] sm:$0xff]
    %v268 = vld [vmem:[#allocation5 + $0x5e0] sm:$0xff]
    %v269 = vld [vmem:[#allocation5 + $0x5e8] sm:$0xff]
    %v270 = vld [vmem:[#allocation5 + $0x5f0] sm:$0xff]
    %v271 = vld [vmem:[#allocation5 + $0x5f8] sm:$0xff]
    %v272 = vld [vmem:[#allocation5 + $0x600] sm:$0xff]
    %v273 = vld [vmem:[#allocation5 + $0x608] sm:$0xff]
    %v274 = vld [vmem:[#allocation5 + $0x610] sm:$0xff]
    %v275 = vld [vmem:[#allocation5 + $0x618] sm:$0xff]
    %v276 = vld [vmem:[#allocation5 + $0x620] sm:$0xff]
    %v277 = vld [vmem:[#allocation5 + $0x628] sm:$0xff]
    %v278 = vld [vmem:[#allocation5 + $0x630] sm:$0xff]
    %v279 = vld [vmem:[#allocation5 + $0x638] sm:$0xff]
    %v280 = vld [vmem:[#allocation5 + $0x640] sm:$0xff]
    %v281 = vld [vmem:[#allocation5 + $0x648] sm:$0xff]
    %v282 = vld [vmem:[#allocation5 + $0x650] sm:$0xff]
    %v283 = vld [vmem:[#allocation5 + $0x658] sm:$0xff]
    %v284 = vld [vmem:[#allocation5 + $0x660] sm:$0xff]
    %v285 = vld [vmem:[#allocation5 + $0x668] sm:$0xff]
    %v286 = vld [vmem:[#allocation5 + $0x670] sm:$0xff]
    %v287 = vld [vmem:[#allocation5 + $0x678] sm:$0xff]
    %v288 = vld [vmem:[#allocation5 + $0x680] sm:$0xff]
    %v289 = vld [vmem:[#allocation5 + $0x688] sm:$0xff]
    %v290 = vld [vmem:[#allocation5 + $0x690] sm:$0xff]
    %v291 = vld [vmem:[#allocation5 + $0x698] sm:$0xff]
    %v292 = vld [vmem:[#allocation5 + $0x6a0] sm:$0xff]
    %v293 = vld [vmem:[#allocation5 + $0x6a8] sm:$0xff]
    %v294 = vld [vmem:[#allocation5 + $0x6b0] sm:$0xff]
    %v295 = vld [vmem:[#allocation5 + $0x6b8] sm:$0xff]
    %v296 = vld [vmem:[#allocation5 + $0x6c0] sm:$0xff]
    %v297 = vld [vmem:[#allocation5 + $0x6c8] sm:$0xff]
    %v298 = vld [vmem:[#allocation5 + $0x6d0] sm:$0xff]
    %v299 = vld [vmem:[#allocation5 + $0x6d8] sm:$0xff]
    %v300 = vld [vmem:[#allocation5 + $0x6e0] sm:$0xff]
    %v301 = vld [vmem:[#allocation5 + $0x6e8] sm:$0xff]
    %v302 = vld [vmem:[#allocation5 + $0x6f0] sm:$0xff]
    %v303 = vld [vmem:[#allocation5 + $0x6f8] sm:$0xff]
    %v304 = vld [vmem:[#allocation5 + $0x700] sm:$0xff]
    %v305 = vld [vmem:[#allocation5 + $0x708] sm:$0xff]
    %v306 = vld [vmem:[#allocation5 + $0x710] sm:$0xff]
    %v307 = vld [vmem:[#allocation5 + $0x718] sm:$0xff]
    %v308 = vld [vmem:[#allocation5 + $0x720] sm:$0xff]
    %v309 = vld [vmem:[#allocation5 + $0x728] sm:$0xff]
    %v310 = vld [vmem:[#allocation5 + $0x730] sm:$0xff]
    %v311 = vld [vmem:[#allocation5 + $0x738] sm:$0xff]
    %v312 = vld [vmem:[#allocation5 + $0x740] sm:$0xff]
    %v313 = vld [vmem:[#allocation5 + $0x748] sm:$0xff]
    %v314 = vld [vmem:[#allocation5 + $0x750] sm:$0xff]
    %v315 = vld [vmem:[#allocation5 + $0x758] sm:$0xff]
    %v316 = vld [vmem:[#allocation5 + $0x760] sm:$0xff]
    %v317 = vld [vmem:[#allocation5 + $0x768] sm:$0xff]
    %v318 = vld [vmem:[#allocation5 + $0x770] sm:$0xff]
    %v319 = vld [vmem:[#allocation5 + $0x778] sm:$0xff]
    %v320 = vld [vmem:[#allocation5 + $0x780] sm:$0xff]
    %v321 = vld [vmem:[#allocation5 + $0x788] sm:$0xff]
    %v322 = vld [vmem:[#allocation5 + $0x790] sm:$0xff]
    %v323 = vld [vmem:[#allocation5 + $0x798] sm:$0xff]
    %v324 = vld [vmem:[#allocation5 + $0x7a0] sm:$0xff]
    %v325 = vld [vmem:[#allocation5 + $0x7a8] sm:$0xff]
    %v326 = vld [vmem:[#allocation5 + $0x7b0] sm:$0xff]
    %v327 = vld [vmem:[#allocation5 + $0x7b8] sm:$0xff]
    %v328 = vld [vmem:[#allocation5 + $0x7c0] sm:$0xff]
    %v329 = vld [vmem:[#allocation5 + $0x7c8] sm:$0xff]
    %v330 = vld [vmem:[#allocation5 + $0x7d0] sm:$0xff]
    %v331 = vld [vmem:[#allocation5 + $0x7d8] sm:$0xff]
    %v332 = vld [vmem:[#allocation5 + $0x7e0] sm:$0xff]
    %v333 = vld [vmem:[#allocation5 + $0x7e8] sm:$0xff]
    %v334 = vld [vmem:[#allocation5 + $0x7f0] sm:$0xff]
    %v335 = vld [vmem:[#allocation5 + $0x7f8] sm:$0xff]
    %v337 = vlaneseq
    %v338 = vshrl.u32 %v337, 7
    %v339 = vsub.s32 0, %v338
    %v340 = vrot.slane %v74, %v339
    %v341 = vlaneseq
    %v342 = vshrl.u32 %v341, 7
    %v343 = vsub.s32 1, %v342
    %v344 = vrot.slane %v74, %v343
    %v345 = vlaneseq
    %v346 = vshrl.u32 %v345, 7
    %v347 = vsub.s32 2, %v346
    %v348 = vrot.slane %v74, %v347
    %v349 = vlaneseq
    %v350 = vshrl.u32 %v349, 7
    %v351 = vsub.s32 3, %v350
    %v352 = vrot.slane %v74, %v351
    %v353 = vlaneseq
    %v354 = vshrl.u32 %v353, 7
    %v355 = vsub.s32 4, %v354
    %v356 = vrot.slane %v74, %v355
    %v357 = vlaneseq
    %v358 = vshrl.u32 %v357, 7
    %v359 = vsub.s32 5, %v358
    %v360 = vrot.slane %v74, %v359
    %v361 = vlaneseq
    %v362 = vshrl.u32 %v361, 7
    %v363 = vsub.s32 6, %v362
    %v364 = vrot.slane %v74, %v363
    %v365 = vlaneseq
    %v366 = vshrl.u32 %v365, 7
    %v367 = vsub.s32 7, %v366
    %v368 = vrot.slane %v74, %v367
    %377 = vmatprep.subr.mxu0 %v201
    %378 = vmatpush1.msra.mxu0 %v200
    %379 = vmatprep.subr.mxu0 %v193
    %380 = vmatpush1.msra.mxu0 %v192
    %381 = vmatprep.subr.mxu0 %v185
    %382 = vmatpush1.msra.mxu0 %v184
    %383 = vmatprep.subr.mxu0 %v177
    %384 = vmatpush1.msra.mxu0 %v176
    %385 = vmatprep.subr.mxu0 %v169
    %386 = vmatpush1.msra.mxu0 %v168
    %387 = vmatprep.subr.mxu0 %v161
    %388 = vmatpush1.msra.mxu0 %v160
    %389 = vmatprep.subr.mxu0 %v153
    %390 = vmatpush1.msra.mxu0 %v152
    %391 = vmatprep.subr.mxu0 %v145
    %392 = vmatpush1.msra.mxu0 %v144
    %393 = vmatprep.subr.mxu0 %v137
    %394 = vmatpush1.msra.mxu0 %v136
    %395 = vmatprep.subr.mxu0 %v129
    %396 = vmatpush1.msra.mxu0 %v128
    %397 = vmatprep.subr.mxu0 %v121
    %398 = vmatpush1.msra.mxu0 %v120
    %399 = vmatprep.subr.mxu0 %v113
    %400 = vmatpush1.msra.mxu0 %v112
    %401 = vmatprep.subr.mxu0 %v105
    %402 = vmatpush1.msra.mxu0 %v104
    %403 = vmatprep.subr.mxu0 %v97
    %404 = vmatpush1.msra.mxu0 %v96
    %405 = vmatprep.subr.mxu0 %v89
    %406 = vmatpush1.msra.mxu0 %v88
    %407 = vmatprep.subr.mxu0 %v81
    %408 = vmatpush1.msra.mxu0 %v80
    %409 = vmatprep.subr.mxu0 %v329
    %410 = vmatpush2.msra.mxu0 %v328
    %411 = vmatprep.subr.mxu0 %v321
    %412 = vmatpush2.msra.mxu0 %v320
    %413 = vmatprep.subr.mxu0 %v313
    %414 = vmatpush2.msra.mxu0 %v312
    %415 = vmatprep.subr.mxu0 %v305
    %416 = vmatpush2.msra.mxu0 %v304
    %417 = vmatprep.subr.mxu0 %v297
    %418 = vmatpush2.msra.mxu0 %v296
    %419 = vmatprep.subr.mxu0 %v289
    %420 = vmatpush2.msra.mxu0 %v288
    %421 = vmatprep.subr.mxu0 %v281
    %422 = vmatpush2.msra.mxu0 %v280
    %423 = vmatprep.subr.mxu0 %v273
    %424 = vmatpush2.msra.mxu0 %v272
    %425 = vmatprep.subr.mxu0 %v265
    %426 = vmatpush2.msra.mxu0 %v264
    %427 = vmatprep.subr.mxu0 %v257
    %428 = vmatpush2.msra.mxu0 %v256
    %429 = vmatprep.subr.mxu0 %v249
    %430 = vmatpush2.msra.mxu0 %v248
    %431 = vmatprep.subr.mxu0 %v241
    %432 = vmatpush2.msra.mxu0 %v240
    %433 = vmatprep.subr.mxu0 %v233
    %434 = vmatpush2.msra.mxu0 %v232
    %435 = vmatprep.subr.mxu0 %v225
    %436 = vmatpush2.msra.mxu0 %v224
    %437 = vmatprep.subr.mxu0 %v217
    %438 = vmatpush2.msra.mxu0 %v216
    %439 = vmatprep.subr.mxu0 %v209
    %440 = vmatpush2.msra.mxu0 %v208
    %441 = vmatprep.mubr.f32.mxu0 %v77
    %442 = vmatmul.mubr.f32.gmra.mxu0 %v76
    %v443 = vpop.f32.mrf.mxu0
    %v444 = vadd.f32 %v340, %v443
    %v445 = vpop.f32.mrf.mxu0
    %v446 = vadd.f32 %v344, %v445
    %447 = vmatprep.mubr.f32.mxu0 %v79
    %448 = vmatmul.mubr.f32.gmra.mxu0 %v78
    %v449 = vpop.f32.mrf.mxu0
    %v450 = vadd.f32 %v340, %v449
    %v451 = vpop.f32.mrf.mxu0
    %v452 = vadd.f32 %v344, %v451
    %453 = vdwg.mxu0
    %454 = vmatprep.subr.mxu0 %v203
    %455 = vmatpush1.msra.mxu0 %v202
    %456 = vmatprep.subr.mxu0 %v195
    %457 = vmatpush1.msra.mxu0 %v194
    %458 = vmatprep.subr.mxu0 %v187
    %459 = vmatpush1.msra.mxu0 %v186
    %460 = vmatprep.subr.mxu0 %v179
    %461 = vmatpush1.msra.mxu0 %v178
    %462 = vmatprep.subr.mxu0 %v171
    %463 = vmatpush1.msra.mxu0 %v170
    %464 = vmatprep.subr.mxu0 %v163
    %465 = vmatpush1.msra.mxu0 %v162
    %466 = vmatprep.subr.mxu0 %v155
    %467 = vmatpush1.msra.mxu0 %v154
    %468 = vmatprep.subr.mxu0 %v147
    %469 = vmatpush1.msra.mxu0 %v146
    %470 = vmatprep.subr.mxu0 %v139
    %471 = vmatpush1.msra.mxu0 %v138
    %472 = vmatprep.subr.mxu0 %v131
    %473 = vmatpush1.msra.mxu0 %v130
    %474 = vmatprep.subr.mxu0 %v123
    %475 = vmatpush1.msra.mxu0 %v122
    %476 = vmatprep.subr.mxu0 %v115
    %477 = vmatpush1.msra.mxu0 %v114
    %478 = vmatprep.subr.mxu0 %v107
    %479 = vmatpush1.msra.mxu0 %v106
    %480 = vmatprep.subr.mxu0 %v99
    %481 = vmatpush1.msra.mxu0 %v98
    %482 = vmatprep.subr.mxu0 %v91
    %483 = vmatpush1.msra.mxu0 %v90
    %484 = vmatprep.subr.mxu0 %v83
    %485 = vmatpush1.msra.mxu0 %v82
    %486 = vmatprep.subr.mxu0 %v331
    %487 = vmatpush2.msra.mxu0 %v330
    %488 = vmatprep.subr.mxu0 %v323
    %489 = vmatpush2.msra.mxu0 %v322
    %490 = vmatprep.subr.mxu0 %v315
    %491 = vmatpush2.msra.mxu0 %v314
    %492 = vmatprep.subr.mxu0 %v307
    %493 = vmatpush2.msra.mxu0 %v306
    %494 = vmatprep.subr.mxu0 %v299
    %495 = vmatpush2.msra.mxu0 %v298
    %496 = vmatprep.subr.mxu0 %v291
    %497 = vmatpush2.msra.mxu0 %v290
    %498 = vmatprep.subr.mxu0 %v283
    %499 = vmatpush2.msra.mxu0 %v282
    %500 = vmatprep.subr.mxu0 %v275
    %501 = vmatpush2.msra.mxu0 %v274
    %502 = vmatprep.subr.mxu0 %v267
    %503 = vmatpush2.msra.mxu0 %v266
    %504 = vmatprep.subr.mxu0 %v259
    %505 = vmatpush2.msra.mxu0 %v258
    %506 = vmatprep.subr.mxu0 %v251
    %507 = vmatpush2.msra.mxu0 %v250
    %508 = vmatprep.subr.mxu0 %v243
    %509 = vmatpush2.msra.mxu0 %v242
    %510 = vmatprep.subr.mxu0 %v235
    %511 = vmatpush2.msra.mxu0 %v234
    %512 = vmatprep.subr.mxu0 %v227
    %513 = vmatpush2.msra.mxu0 %v226
    %514 = vmatprep.subr.mxu0 %v219
    %515 = vmatpush2.msra.mxu0 %v218
    %516 = vmatprep.subr.mxu0 %v211
    %517 = vmatpush2.msra.mxu0 %v210
    %518 = vmatprep.mubr.f32.mxu0 %v77
    %519 = vmatmul.mubr.f32.gmra.mxu0 %v76
    %v520 = vpop.f32.mrf.mxu0
    %v521 = vadd.f32 %v348, %v520
    %v522 = vpop.f32.mrf.mxu0
    %v523 = vadd.f32 %v352, %v522
    %524 = vmatprep.mubr.f32.mxu0 %v79
    %525 = vmatmul.mubr.f32.gmra.mxu0 %v78
    %v526 = vpop.f32.mrf.mxu0
    %v527 = vadd.f32 %v348, %v526
    %v528 = vpop.f32.mrf.mxu0
    %v529 = vadd.f32 %v352, %v528
    %530 = vdwg.mxu0
    %531 = vmatprep.subr.mxu0 %v205
    %532 = vmatpush1.msra.mxu0 %v204
    %533 = vmatprep.subr.mxu0 %v197
    %534 = vmatpush1.msra.mxu0 %v196
    %535 = vmatprep.subr.mxu0 %v189
    %536 = vmatpush1.msra.mxu0 %v188
    %537 = vmatprep.subr.mxu0 %v181
    %538 = vmatpush1.msra.mxu0 %v180
    %539 = vmatprep.subr.mxu0 %v173
    %540 = vmatpush1.msra.mxu0 %v172
    %541 = vmatprep.subr.mxu0 %v165
    %542 = vmatpush1.msra.mxu0 %v164
    %543 = vmatprep.subr.mxu0 %v157
    %544 = vmatpush1.msra.mxu0 %v156
    %545 = vmatprep.subr.mxu0 %v149
    %546 = vmatpush1.msra.mxu0 %v148
    %547 = vmatprep.subr.mxu0 %v141
    %548 = vmatpush1.msra.mxu0 %v140
    %549 = vmatprep.subr.mxu0 %v133
    %550 = vmatpush1.msra.mxu0 %v132
    %551 = vmatprep.subr.mxu0 %v125
    %552 = vmatpush1.msra.mxu0 %v124
    %553 = vmatprep.subr.mxu0 %v117
    %554 = vmatpush1.msra.mxu0 %v116
    %555 = vmatprep.subr.mxu0 %v109
    %556 = vmatpush1.msra.mxu0 %v108
    %557 = vmatprep.subr.mxu0 %v101
    %558 = vmatpush1.msra.mxu0 %v100
    %559 = vmatprep.subr.mxu0 %v93
    %560 = vmatpush1.msra.mxu0 %v92
    %561 = vmatprep.subr.mxu0 %v85
    %562 = vmatpush1.msra.mxu0 %v84
    %563 = vmatprep.subr.mxu0 %v333
    %564 = vmatpush2.msra.mxu0 %v332
    %565 = vmatprep.subr.mxu0 %v325
    %566 = vmatpush2.msra.mxu0 %v324
    %567 = vmatprep.subr.mxu0 %v317
    %568 = vmatpush2.msra.mxu0 %v316
    %569 = vmatprep.subr.mxu0 %v309
    %570 = vmatpush2.msra.mxu0 %v308
    %571 = vmatprep.subr.mxu0 %v301
    %572 = vmatpush2.msra.mxu0 %v300
    %573 = vmatprep.subr.mxu0 %v293
    %574 = vmatpush2.msra.mxu0 %v292
    %575 = vmatprep.subr.mxu0 %v285
    %576 = vmatpush2.msra.mxu0 %v284
    %577 = vmatprep.subr.mxu0 %v277
    %578 = vmatpush2.msra.mxu0 %v276
    %579 = vmatprep.subr.mxu0 %v269
    %580 = vmatpush2.msra.mxu0 %v268
    %581 = vmatprep.subr.mxu0 %v261
    %582 = vmatpush2.msra.mxu0 %v260
    %583 = vmatprep.subr.mxu0 %v253
    %584 = vmatpush2.msra.mxu0 %v252
    %585 = vmatprep.subr.mxu0 %v245
    %586 = vmatpush2.msra.mxu0 %v244
    %587 = vmatprep.subr.mxu0 %v237
    %588 = vmatpush2.msra.mxu0 %v236
    %589 = vmatprep.subr.mxu0 %v229
    %590 = vmatpush2.msra.mxu0 %v228
    %591 = vmatprep.subr.mxu0 %v221
    %592 = vmatpush2.msra.mxu0 %v220
    %593 = vmatprep.subr.mxu0 %v213
    %594 = vmatpush2.msra.mxu0 %v212
    %595 = vmatprep.mubr.f32.mxu0 %v77
    %596 = vmatmul.mubr.f32.gmra.mxu0 %v76
    %v597 = vpop.f32.mrf.mxu0
    %v598 = vadd.f32 %v356, %v597
    %v599 = vpop.f32.mrf.mxu0
    %v600 = vadd.f32 %v360, %v599
    %601 = vmatprep.mubr.f32.mxu0 %v79
    %602 = vmatmul.mubr.f32.gmra.mxu0 %v78
    %v603 = vpop.f32.mrf.mxu0
    %v604 = vadd.f32 %v356, %v603
    %v605 = vpop.f32.mrf.mxu0
    %v606 = vadd.f32 %v360, %v605
    %607 = vdwg.mxu0
    %608 = vmatprep.subr.mxu0 %v207
    %609 = vmatpush1.msra.mxu0 %v206
    %610 = vmatprep.subr.mxu0 %v199
    %611 = vmatpush1.msra.mxu0 %v198
    %612 = vmatprep.subr.mxu0 %v191
    %613 = vmatpush1.msra.mxu0 %v190
    %614 = vmatprep.subr.mxu0 %v183
    %615 = vmatpush1.msra.mxu0 %v182
    %616 = vmatprep.subr.mxu0 %v175
    %617 = vmatpush1.msra.mxu0 %v174
    %618 = vmatprep.subr.mxu0 %v167
    %619 = vmatpush1.msra.mxu0 %v166
    %620 = vmatprep.subr.mxu0 %v159
    %621 = vmatpush1.msra.mxu0 %v158
    %622 = vmatprep.subr.mxu0 %v151
    %623 = vmatpush1.msra.mxu0 %v150
    %624 = vmatprep.subr.mxu0 %v143
    %625 = vmatpush1.msra.mxu0 %v142
    %626 = vmatprep.subr.mxu0 %v135
    %627 = vmatpush1.msra.mxu0 %v134
    %628 = vmatprep.subr.mxu0 %v127
    %629 = vmatpush1.msra.mxu0 %v126
    %630 = vmatprep.subr.mxu0 %v119
    %631 = vmatpush1.msra.mxu0 %v118
    %632 = vmatprep.subr.mxu0 %v111
    %633 = vmatpush1.msra.mxu0 %v110
    %634 = vmatprep.subr.mxu0 %v103
    %635 = vmatpush1.msra.mxu0 %v102
    %636 = vmatprep.subr.mxu0 %v95
    %637 = vmatpush1.msra.mxu0 %v94
    %638 = vmatprep.subr.mxu0 %v87
    %639 = vmatpush1.msra.mxu0 %v86
    %640 = vmatprep.subr.mxu0 %v335
    %641 = vmatpush2.msra.mxu0 %v334
    %642 = vmatprep.subr.mxu0 %v327
    %643 = vmatpush2.msra.mxu0 %v326
    %644 = vmatprep.subr.mxu0 %v319
    %645 = vmatpush2.msra.mxu0 %v318
    %646 = vmatprep.subr.mxu0 %v311
    %647 = vmatpush2.msra.mxu0 %v310
    %648 = vmatprep.subr.mxu0 %v303
    %649 = vmatpush2.msra.mxu0 %v302
    %650 = vmatprep.subr.mxu0 %v295
    %651 = vmatpush2.msra.mxu0 %v294
    %652 = vmatprep.subr.mxu0 %v287
    %653 = vmatpush2.msra.mxu0 %v286
    %654 = vmatprep.subr.mxu0 %v279
    %655 = vmatpush2.msra.mxu0 %v278
    %656 = vmatprep.subr.mxu0 %v271
    %657 = vmatpush2.msra.mxu0 %v270
    %658 = vmatprep.subr.mxu0 %v263
    %659 = vmatpush2.msra.mxu0 %v262
    %660 = vmatprep.subr.mxu0 %v255
    %661 = vmatpush2.msra.mxu0 %v254
    %662 = vmatprep.subr.mxu0 %v247
    %663 = vmatpush2.msra.mxu0 %v246
    %664 = vmatprep.subr.mxu0 %v239
    %665 = vmatpush2.msra.mxu0 %v238
    %666 = vmatprep.subr.mxu0 %v231
    %667 = vmatpush2.msra.mxu0 %v230
    %668 = vmatprep.subr.mxu0 %v223
    %669 = vmatpush2.msra.mxu0 %v222
    %670 = vmatprep.subr.mxu0 %v215
    %671 = vmatpush2.msra.mxu0 %v214
    %672 = vmatprep.mubr.f32.mxu0 %v77
    %673 = vmatmul.mubr.f32.gmra.mxu0 %v76
    %v674 = vpop.f32.mrf.mxu0
    %v675 = vadd.f32 %v364, %v674
    %v676 = vpop.f32.mrf.mxu0
    %v677 = vadd.f32 %v368, %v676
    %678 = vmatprep.mubr.f32.mxu0 %v79
    %679 = vmatmul.mubr.f32.gmra.mxu0 %v78
    %v680 = vpop.f32.mrf.mxu0
    %v681 = vadd.f32 %v364, %v680
    %v682 = vpop.f32.mrf.mxu0
    %v683 = vadd.f32 %v368, %v682
    %684 = vdwg.mxu0
    %v685 = vmax.f32 %v444, 0.0
    %v686 = vmax.f32 %v446, 0.0
    %v687 = vmax.f32 %v521, 0.0
    %v688 = vmax.f32 %v523, 0.0
    %v689 = vmax.f32 %v598, 0.0
    %v690 = vmax.f32 %v600, 0.0
    %v691 = vmax.f32 %v675, 0.0
    %v692 = vmax.f32 %v677, 0.0
    %v693 = vmax.f32 %v450, 0.0
    %v694 = vmax.f32 %v452, 0.0
    %v695 = vmax.f32 %v527, 0.0
    %v696 = vmax.f32 %v529, 0.0
    %v697 = vmax.f32 %v604, 0.0
    %v698 = vmax.f32 %v606, 0.0
    %v699 = vmax.f32 %v681, 0.0
    %v700 = vmax.f32 %v683, 0.0
    %v701 = vld [vmem:[#allocation8] sm:$0xff]
    %v702 = vld [vmem:[#allocation8 + $0x8] sm:$0xff]
    %v703 = vld [vmem:[#allocation8 + $0x10] sm:$0xff]
    %v704 = vld [vmem:[#allocation8 + $0x18] sm:$0xff]
    %v705 = vld [vmem:[#allocation8 + $0x20] sm:$0xff]
    %v706 = vld [vmem:[#allocation8 + $0x28] sm:$0xff]
    %v707 = vld [vmem:[#allocation8 + $0x30] sm:$0xff]
    %v708 = vld [vmem:[#allocation8 + $0x38] sm:$0xff]
    %v709 = vld [vmem:[#allocation8 + $0x40] sm:$0xff]
    %v710 = vld [vmem:[#allocation8 + $0x48] sm:$0xff]
    %v711 = vld [vmem:[#allocation8 + $0x50] sm:$0xff]
    %v712 = vld [vmem:[#allocation8 + $0x58] sm:$0xff]
    %v713 = vld [vmem:[#allocation8 + $0x60] sm:$0xff]
    %v714 = vld [vmem:[#allocation8 + $0x68] sm:$0xff]
    %v715 = vld [vmem:[#allocation8 + $0x70] sm:$0xff]
    %v716 = vld [vmem:[#allocation8 + $0x78] sm:$0xff]
    %v717 = vld [vmem:[#allocation8 + $0x80] sm:$0xff]
    %v718 = vld [vmem:[#allocation8 + $0x88] sm:$0xff]
    %v719 = vld [vmem:[#allocation8 + $0x90] sm:$0xff]
    %v720 = vld [vmem:[#allocation8 + $0x98] sm:$0xff]
    %v721 = vld [vmem:[#allocation8 + $0xa0] sm:$0xff]
    %v722 = vld [vmem:[#allocation8 + $0xa8] sm:$0xff]
    %v723 = vld [vmem:[#allocation8 + $0xb0] sm:$0xff]
    %v724 = vld [vmem:[#allocation8 + $0xb8] sm:$0xff]
    %v725 = vld [vmem:[#allocation8 + $0xc0] sm:$0xff]
    %v726 = vld [vmem:[#allocation8 + $0xc8] sm:$0xff]
    %v727 = vld [vmem:[#allocation8 + $0xd0] sm:$0xff]
    %v728 = vld [vmem:[#allocation8 + $0xd8] sm:$0xff]
    %v729 = vld [vmem:[#allocation8 + $0xe0] sm:$0xff]
    %v730 = vld [vmem:[#allocation8 + $0xe8] sm:$0xff]
    %v731 = vld [vmem:[#allocation8 + $0xf0] sm:$0xff]
    %v732 = vld [vmem:[#allocation8 + $0xf8] sm:$0xff]
    %v733 = vld [vmem:[#allocation8 + $0x100] sm:$0xff]
    %v734 = vld [vmem:[#allocation8 + $0x108] sm:$0xff]
    %v735 = vld [vmem:[#allocation8 + $0x110] sm:$0xff]
    %v736 = vld [vmem:[#allocation8 + $0x118] sm:$0xff]
    %v737 = vld [vmem:[#allocation8 + $0x120] sm:$0xff]
    %v738 = vld [vmem:[#allocation8 + $0x128] sm:$0xff]
    %v739 = vld [vmem:[#allocation8 + $0x130] sm:$0xff]
    %v740 = vld [vmem:[#allocation8 + $0x138] sm:$0xff]
    %v741 = vld [vmem:[#allocation8 + $0x140] sm:$0xff]
    %v742 = vld [vmem:[#allocation8 + $0x148] sm:$0xff]
    %v743 = vld [vmem:[#allocation8 + $0x150] sm:$0xff]
    %v744 = vld [vmem:[#allocation8 + $0x158] sm:$0xff]
    %v745 = vld [vmem:[#allocation8 + $0x160] sm:$0xff]
    %v746 = vld [vmem:[#allocation8 + $0x168] sm:$0xff]
    %v747 = vld [vmem:[#allocation8 + $0x170] sm:$0xff]
    %v748 = vld [vmem:[#allocation8 + $0x178] sm:$0xff]
    %v749 = vld [vmem:[#allocation8 + $0x180] sm:$0xff]
    %v750 = vld [vmem:[#allocation8 + $0x188] sm:$0xff]
    %v751 = vld [vmem:[#allocation8 + $0x190] sm:$0xff]
    %v752 = vld [vmem:[#allocation8 + $0x198] sm:$0xff]
    %v753 = vld [vmem:[#allocation8 + $0x1a0] sm:$0xff]
    %v754 = vld [vmem:[#allocation8 + $0x1a8] sm:$0xff]
    %v755 = vld [vmem:[#allocation8 + $0x1b0] sm:$0xff]
    %v756 = vld [vmem:[#allocation8 + $0x1b8] sm:$0xff]
    %v757 = vld [vmem:[#allocation8 + $0x1c0] sm:$0xff]
    %v758 = vld [vmem:[#allocation8 + $0x1c8] sm:$0xff]
    %v759 = vld [vmem:[#allocation8 + $0x1d0] sm:$0xff]
    %v760 = vld [vmem:[#allocation8 + $0x1d8] sm:$0xff]
    %v761 = vld [vmem:[#allocation8 + $0x1e0] sm:$0xff]
    %v762 = vld [vmem:[#allocation8 + $0x1e8] sm:$0xff]
    %v763 = vld [vmem:[#allocation8 + $0x1f0] sm:$0xff]
    %v764 = vld [vmem:[#allocation8 + $0x1f8] sm:$0xff]
    %v765 = vld [vmem:[#allocation8 + $0x200] sm:$0xff]
    %v766 = vld [vmem:[#allocation8 + $0x208] sm:$0xff]
    %v767 = vld [vmem:[#allocation8 + $0x210] sm:$0xff]
    %v768 = vld [vmem:[#allocation8 + $0x218] sm:$0xff]
    %v769 = vld [vmem:[#allocation8 + $0x220] sm:$0xff]
    %v770 = vld [vmem:[#allocation8 + $0x228] sm:$0xff]
    %v771 = vld [vmem:[#allocation8 + $0x230] sm:$0xff]
    %v772 = vld [vmem:[#allocation8 + $0x238] sm:$0xff]
    %v773 = vld [vmem:[#allocation8 + $0x240] sm:$0xff]
    %v774 = vld [vmem:[#allocation8 + $0x248] sm:$0xff]
    %v775 = vld [vmem:[#allocation8 + $0x250] sm:$0xff]
    %v776 = vld [vmem:[#allocation8 + $0x258] sm:$0xff]
    %v777 = vld [vmem:[#allocation8 + $0x260] sm:$0xff]
    %v778 = vld [vmem:[#allocation8 + $0x268] sm:$0xff]
    %v779 = vld [vmem:[#allocation8 + $0x270] sm:$0xff]
    %v780 = vld [vmem:[#allocation8 + $0x278] sm:$0xff]
    %v781 = vld [vmem:[#allocation8 + $0x280] sm:$0xff]
    %v782 = vld [vmem:[#allocation8 + $0x288] sm:$0xff]
    %v783 = vld [vmem:[#allocation8 + $0x290] sm:$0xff]
    %v784 = vld [vmem:[#allocation8 + $0x298] sm:$0xff]
    %v785 = vld [vmem:[#allocation8 + $0x2a0] sm:$0xff]
    %v786 = vld [vmem:[#allocation8 + $0x2a8] sm:$0xff]
    %v787 = vld [vmem:[#allocation8 + $0x2b0] sm:$0xff]
    %v788 = vld [vmem:[#allocation8 + $0x2b8] sm:$0xff]
    %v789 = vld [vmem:[#allocation8 + $0x2c0] sm:$0xff]
    %v790 = vld [vmem:[#allocation8 + $0x2c8] sm:$0xff]
    %v791 = vld [vmem:[#allocation8 + $0x2d0] sm:$0xff]
    %v792 = vld [vmem:[#allocation8 + $0x2d8] sm:$0xff]
    %v793 = vld [vmem:[#allocation8 + $0x2e0] sm:$0xff]
    %v794 = vld [vmem:[#allocation8 + $0x2e8] sm:$0xff]
    %v795 = vld [vmem:[#allocation8 + $0x2f0] sm:$0xff]
    %v796 = vld [vmem:[#allocation8 + $0x2f8] sm:$0xff]
    %v797 = vld [vmem:[#allocation8 + $0x300] sm:$0xff]
    %v798 = vld [vmem:[#allocation8 + $0x308] sm:$0xff]
    %v799 = vld [vmem:[#allocation8 + $0x310] sm:$0xff]
    %v800 = vld [vmem:[#allocation8 + $0x318] sm:$0xff]
    %v801 = vld [vmem:[#allocation8 + $0x320] sm:$0xff]
    %v802 = vld [vmem:[#allocation8 + $0x328] sm:$0xff]
    %v803 = vld [vmem:[#allocation8 + $0x330] sm:$0xff]
    %v804 = vld [vmem:[#allocation8 + $0x338] sm:$0xff]
    %v805 = vld [vmem:[#allocation8 + $0x340] sm:$0xff]
    %v806 = vld [vmem:[#allocation8 + $0x348] sm:$0xff]
    %v807 = vld [vmem:[#allocation8 + $0x350] sm:$0xff]
    %v808 = vld [vmem:[#allocation8 + $0x358] sm:$0xff]
    %v809 = vld [vmem:[#allocation8 + $0x360] sm:$0xff]
    %v810 = vld [vmem:[#allocation8 + $0x368] sm:$0xff]
    %v811 = vld [vmem:[#allocation8 + $0x370] sm:$0xff]
    %v812 = vld [vmem:[#allocation8 + $0x378] sm:$0xff]
    %v813 = vld [vmem:[#allocation8 + $0x380] sm:$0xff]
    %v814 = vld [vmem:[#allocation8 + $0x388] sm:$0xff]
    %v815 = vld [vmem:[#allocation8 + $0x390] sm:$0xff]
    %v816 = vld [vmem:[#allocation8 + $0x398] sm:$0xff]
    %v817 = vld [vmem:[#allocation8 + $0x3a0] sm:$0xff]
    %v818 = vld [vmem:[#allocation8 + $0x3a8] sm:$0xff]
    %v819 = vld [vmem:[#allocation8 + $0x3b0] sm:$0xff]
    %v820 = vld [vmem:[#allocation8 + $0x3b8] sm:$0xff]
    %v821 = vld [vmem:[#allocation8 + $0x3c0] sm:$0xff]
    %v822 = vld [vmem:[#allocation8 + $0x3c8] sm:$0xff]
    %v823 = vld [vmem:[#allocation8 + $0x3d0] sm:$0xff]
    %v824 = vld [vmem:[#allocation8 + $0x3d8] sm:$0xff]
    %v825 = vld [vmem:[#allocation8 + $0x3e0] sm:$0xff]
    %v826 = vld [vmem:[#allocation8 + $0x3e8] sm:$0xff]
    %v827 = vld [vmem:[#allocation8 + $0x3f0] sm:$0xff]
    %v828 = vld [vmem:[#allocation8 + $0x3f8] sm:$0xff]
    %v829 = vld [vmem:[#allocation8 + $0x400] sm:$0xff]
    %v830 = vld [vmem:[#allocation8 + $0x408] sm:$0xff]
    %v831 = vld [vmem:[#allocation8 + $0x410] sm:$0xff]
    %v832 = vld [vmem:[#allocation8 + $0x418] sm:$0xff]
    %v833 = vld [vmem:[#allocation8 + $0x420] sm:$0xff]
    %v834 = vld [vmem:[#allocation8 + $0x428] sm:$0xff]
    %v835 = vld [vmem:[#allocation8 + $0x430] sm:$0xff]
    %v836 = vld [vmem:[#allocation8 + $0x438] sm:$0xff]
    %v837 = vld [vmem:[#allocation8 + $0x440] sm:$0xff]
    %v838 = vld [vmem:[#allocation8 + $0x448] sm:$0xff]
    %v839 = vld [vmem:[#allocation8 + $0x450] sm:$0xff]
    %v840 = vld [vmem:[#allocation8 + $0x458] sm:$0xff]
    %v841 = vld [vmem:[#allocation8 + $0x460] sm:$0xff]
    %v842 = vld [vmem:[#allocation8 + $0x468] sm:$0xff]
    %v843 = vld [vmem:[#allocation8 + $0x470] sm:$0xff]
    %v844 = vld [vmem:[#allocation8 + $0x478] sm:$0xff]
    %v845 = vld [vmem:[#allocation8 + $0x480] sm:$0xff]
    %v846 = vld [vmem:[#allocation8 + $0x488] sm:$0xff]
    %v847 = vld [vmem:[#allocation8 + $0x490] sm:$0xff]
    %v848 = vld [vmem:[#allocation8 + $0x498] sm:$0xff]
    %v849 = vld [vmem:[#allocation8 + $0x4a0] sm:$0xff]
    %v850 = vld [vmem:[#allocation8 + $0x4a8] sm:$0xff]
    %v851 = vld [vmem:[#allocation8 + $0x4b0] sm:$0xff]
    %v852 = vld [vmem:[#allocation8 + $0x4b8] sm:$0xff]
    %v853 = vld [vmem:[#allocation8 + $0x4c0] sm:$0xff]
    %v854 = vld [vmem:[#allocation8 + $0x4c8] sm:$0xff]
    %v855 = vld [vmem:[#allocation8 + $0x4d0] sm:$0xff]
    %v856 = vld [vmem:[#allocation8 + $0x4d8] sm:$0xff]
    %v857 = vld [vmem:[#allocation8 + $0x4e0] sm:$0xff]
    %v858 = vld [vmem:[#allocation8 + $0x4e8] sm:$0xff]
    %v859 = vld [vmem:[#allocation8 + $0x4f0] sm:$0xff]
    %v860 = vld [vmem:[#allocation8 + $0x4f8] sm:$0xff]
    %v861 = vld [vmem:[#allocation8 + $0x500] sm:$0xff]
    %v862 = vld [vmem:[#allocation8 + $0x508] sm:$0xff]
    %v863 = vld [vmem:[#allocation8 + $0x510] sm:$0xff]
    %v864 = vld [vmem:[#allocation8 + $0x518] sm:$0xff]
    %v865 = vld [vmem:[#allocation8 + $0x520] sm:$0xff]
    %v866 = vld [vmem:[#allocation8 + $0x528] sm:$0xff]
    %v867 = vld [vmem:[#allocation8 + $0x530] sm:$0xff]
    %v868 = vld [vmem:[#allocation8 + $0x538] sm:$0xff]
    %v869 = vld [vmem:[#allocation8 + $0x540] sm:$0xff]
    %v870 = vld [vmem:[#allocation8 + $0x548] sm:$0xff]
    %v871 = vld [vmem:[#allocation8 + $0x550] sm:$0xff]
    %v872 = vld [vmem:[#allocation8 + $0x558] sm:$0xff]
    %v873 = vld [vmem:[#allocation8 + $0x560] sm:$0xff]
    %v874 = vld [vmem:[#allocation8 + $0x568] sm:$0xff]
    %v875 = vld [vmem:[#allocation8 + $0x570] sm:$0xff]
    %v876 = vld [vmem:[#allocation8 + $0x578] sm:$0xff]
    %v877 = vld [vmem:[#allocation8 + $0x580] sm:$0xff]
    %v878 = vld [vmem:[#allocation8 + $0x588] sm:$0xff]
    %v879 = vld [vmem:[#allocation8 + $0x590] sm:$0xff]
    %v880 = vld [vmem:[#allocation8 + $0x598] sm:$0xff]
    %v881 = vld [vmem:[#allocation8 + $0x5a0] sm:$0xff]
    %v882 = vld [vmem:[#allocation8 + $0x5a8] sm:$0xff]
    %v883 = vld [vmem:[#allocation8 + $0x5b0] sm:$0xff]
    %v884 = vld [vmem:[#allocation8 + $0x5b8] sm:$0xff]
    %v885 = vld [vmem:[#allocation8 + $0x5c0] sm:$0xff]
    %v886 = vld [vmem:[#allocation8 + $0x5c8] sm:$0xff]
    %v887 = vld [vmem:[#allocation8 + $0x5d0] sm:$0xff]
    %v888 = vld [vmem:[#allocation8 + $0x5d8] sm:$0xff]
    %v889 = vld [vmem:[#allocation8 + $0x5e0] sm:$0xff]
    %v890 = vld [vmem:[#allocation8 + $0x5e8] sm:$0xff]
    %v891 = vld [vmem:[#allocation8 + $0x5f0] sm:$0xff]
    %v892 = vld [vmem:[#allocation8 + $0x5f8] sm:$0xff]
    %v893 = vld [vmem:[#allocation8 + $0x600] sm:$0xff]
    %v894 = vld [vmem:[#allocation8 + $0x608] sm:$0xff]
    %v895 = vld [vmem:[#allocation8 + $0x610] sm:$0xff]
    %v896 = vld [vmem:[#allocation8 + $0x618] sm:$0xff]
    %v897 = vld [vmem:[#allocation8 + $0x620] sm:$0xff]
    %v898 = vld [vmem:[#allocation8 + $0x628] sm:$0xff]
    %v899 = vld [vmem:[#allocation8 + $0x630] sm:$0xff]
    %v900 = vld [vmem:[#allocation8 + $0x638] sm:$0xff]
    %v901 = vld [vmem:[#allocation8 + $0x640] sm:$0xff]
    %v902 = vld [vmem:[#allocation8 + $0x648] sm:$0xff]
    %v903 = vld [vmem:[#allocation8 + $0x650] sm:$0xff]
    %v904 = vld [vmem:[#allocation8 + $0x658] sm:$0xff]
    %v905 = vld [vmem:[#allocation8 + $0x660] sm:$0xff]
    %v906 = vld [vmem:[#allocation8 + $0x668] sm:$0xff]
    %v907 = vld [vmem:[#allocation8 + $0x670] sm:$0xff]
    %v908 = vld [vmem:[#allocation8 + $0x678] sm:$0xff]
    %v909 = vld [vmem:[#allocation8 + $0x680] sm:$0xff]
    %v910 = vld [vmem:[#allocation8 + $0x688] sm:$0xff]
    %v911 = vld [vmem:[#allocation8 + $0x690] sm:$0xff]
    %v912 = vld [vmem:[#allocation8 + $0x698] sm:$0xff]
    %v913 = vld [vmem:[#allocation8 + $0x6a0] sm:$0xff]
    %v914 = vld [vmem:[#allocation8 + $0x6a8] sm:$0xff]
    %v915 = vld [vmem:[#allocation8 + $0x6b0] sm:$0xff]
    %v916 = vld [vmem:[#allocation8 + $0x6b8] sm:$0xff]
    %v917 = vld [vmem:[#allocation8 + $0x6c0] sm:$0xff]
    %v918 = vld [vmem:[#allocation8 + $0x6c8] sm:$0xff]
    %v919 = vld [vmem:[#allocation8 + $0x6d0] sm:$0xff]
    %v920 = vld [vmem:[#allocation8 + $0x6d8] sm:$0xff]
    %v921 = vld [vmem:[#allocation8 + $0x6e0] sm:$0xff]
    %v922 = vld [vmem:[#allocation8 + $0x6e8] sm:$0xff]
    %v923 = vld [vmem:[#allocation8 + $0x6f0] sm:$0xff]
    %v924 = vld [vmem:[#allocation8 + $0x6f8] sm:$0xff]
    %v925 = vld [vmem:[#allocation8 + $0x700] sm:$0xff]
    %v926 = vld [vmem:[#allocation8 + $0x708] sm:$0xff]
    %v927 = vld [vmem:[#allocation8 + $0x710] sm:$0xff]
    %v928 = vld [vmem:[#allocation8 + $0x718] sm:$0xff]
    %v929 = vld [vmem:[#allocation8 + $0x720] sm:$0xff]
    %v930 = vld [vmem:[#allocation8 + $0x728] sm:$0xff]
    %v931 = vld [vmem:[#allocation8 + $0x730] sm:$0xff]
    %v932 = vld [vmem:[#allocation8 + $0x738] sm:$0xff]
    %v933 = vld [vmem:[#allocation8 + $0x740] sm:$0xff]
    %v934 = vld [vmem:[#allocation8 + $0x748] sm:$0xff]
    %v935 = vld [vmem:[#allocation8 + $0x750] sm:$0xff]
    %v936 = vld [vmem:[#allocation8 + $0x758] sm:$0xff]
    %v937 = vld [vmem:[#allocation8 + $0x760] sm:$0xff]
    %v938 = vld [vmem:[#allocation8 + $0x768] sm:$0xff]
    %v939 = vld [vmem:[#allocation8 + $0x770] sm:$0xff]
    %v940 = vld [vmem:[#allocation8 + $0x778] sm:$0xff]
    %v941 = vld [vmem:[#allocation8 + $0x780] sm:$0xff]
    %v942 = vld [vmem:[#allocation8 + $0x788] sm:$0xff]
    %v943 = vld [vmem:[#allocation8 + $0x790] sm:$0xff]
    %v944 = vld [vmem:[#allocation8 + $0x798] sm:$0xff]
    %v945 = vld [vmem:[#allocation8 + $0x7a0] sm:$0xff]
    %v946 = vld [vmem:[#allocation8 + $0x7a8] sm:$0xff]
    %v947 = vld [vmem:[#allocation8 + $0x7b0] sm:$0xff]
    %v948 = vld [vmem:[#allocation8 + $0x7b8] sm:$0xff]
    %v949 = vld [vmem:[#allocation8 + $0x7c0] sm:$0xff]
    %v950 = vld [vmem:[#allocation8 + $0x7c8] sm:$0xff]
    %v951 = vld [vmem:[#allocation8 + $0x7d0] sm:$0xff]
    %v952 = vld [vmem:[#allocation8 + $0x7d8] sm:$0xff]
    %v953 = vld [vmem:[#allocation8 + $0x7e0] sm:$0xff]
    %v954 = vld [vmem:[#allocation8 + $0x7e8] sm:$0xff]
    %v955 = vld [vmem:[#allocation8 + $0x7f0] sm:$0xff]
    %v956 = vld [vmem:[#allocation8 + $0x7f8] sm:$0xff]
    %v958 = vlaneseq
    %v959 = vshrl.u32 %v958, 7
    %v960 = vsub.s32 0, %v959
    %v961 = vrot.slane %v75, %v960
    %v962 = vlaneseq
    %v963 = vshrl.u32 %v962, 7
    %v964 = vsub.s32 1, %v963
    %v965 = vrot.slane %v75, %v964
    %968 = vmatprep.subr.mxu0 %v732
    %969 = vmatpush1.msra.mxu0 %v731
    %970 = vmatprep.subr.mxu0 %v730
    %971 = vmatpush1.msra.mxu0 %v729
    %972 = vmatprep.subr.mxu0 %v728
    %973 = vmatpush1.msra.mxu0 %v727
    %974 = vmatprep.subr.mxu0 %v726
    %975 = vmatpush1.msra.mxu0 %v725
    %976 = vmatprep.subr.mxu0 %v724
    %977 = vmatpush1.msra.mxu0 %v723
    %978 = vmatprep.subr.mxu0 %v722
    %979 = vmatpush1.msra.mxu0 %v721
    %980 = vmatprep.subr.mxu0 %v720
    %981 = vmatpush1.msra.mxu0 %v719
    %982 = vmatprep.subr.mxu0 %v718
    %983 = vmatpush1.msra.mxu0 %v717
    %984 = vmatprep.subr.mxu0 %v716
    %985 = vmatpush1.msra.mxu0 %v715
    %986 = vmatprep.subr.mxu0 %v714
    %987 = vmatpush1.msra.mxu0 %v713
    %988 = vmatprep.subr.mxu0 %v712
    %989 = vmatpush1.msra.mxu0 %v711
    %990 = vmatprep.subr.mxu0 %v710
    %991 = vmatpush1.msra.mxu0 %v709
    %992 = vmatprep.subr.mxu0 %v708
    %993 = vmatpush1.msra.mxu0 %v707
    %994 = vmatprep.subr.mxu0 %v706
    %995 = vmatpush1.msra.mxu0 %v705
    %996 = vmatprep.subr.mxu0 %v704
    %997 = vmatpush1.msra.mxu0 %v703
    %998 = vmatprep.subr.mxu0 %v702
    %999 = vmatpush1.msra.mxu0 %v701
    %1000 = vmatprep.subr.mxu0 %v764
    %1001 = vmatpush2.msra.mxu0 %v763
    %1002 = vmatprep.subr.mxu0 %v762
    %1003 = vmatpush2.msra.mxu0 %v761
    %1004 = vmatprep.subr.mxu0 %v760
    %1005 = vmatpush2.msra.mxu0 %v759
    %1006 = vmatprep.subr.mxu0 %v758
    %1007 = vmatpush2.msra.mxu0 %v757
    %1008 = vmatprep.subr.mxu0 %v756
    %1009 = vmatpush2.msra.mxu0 %v755
    %1010 = vmatprep.subr.mxu0 %v754
    %1011 = vmatpush2.msra.mxu0 %v753
    %1012 = vmatprep.subr.mxu0 %v752
    %1013 = vmatpush2.msra.mxu0 %v751
    %1014 = vmatprep.subr.mxu0 %v750
    %1015 = vmatpush2.msra.mxu0 %v749
    %1016 = vmatprep.subr.mxu0 %v748
    %1017 = vmatpush2.msra.mxu0 %v747
    %1018 = vmatprep.subr.mxu0 %v746
    %1019 = vmatpush2.msra.mxu0 %v745
    %1020 = vmatprep.subr.mxu0 %v744
    %1021 = vmatpush2.msra.mxu0 %v743
    %1022 = vmatprep.subr.mxu0 %v742
    %1023 = vmatpush2.msra.mxu0 %v741
    %1024 = vmatprep.subr.mxu0 %v740
    %1025 = vmatpush2.msra.mxu0 %v739
    %1026 = vmatprep.subr.mxu0 %v738
    %1027 = vmatpush2.msra.mxu0 %v737
    %1028 = vmatprep.subr.mxu0 %v736
    %1029 = vmatpush2.msra.mxu0 %v735
    %1030 = vmatprep.subr.mxu0 %v734
    %1031 = vmatpush2.msra.mxu0 %v733
    %1032 = vmatprep.mubr.f32.mxu0 %v686
    %1033 = vmatmul.mubr.f32.gmra.mxu0 %v685
    %v1034 = vpop.f32.mrf.mxu0
    %v1035 = vadd.f32 %v961, %v1034
    %v1036 = vpop.f32.mrf.mxu0
    %v1037 = vadd.f32 %v965, %v1036
    %1038 = vmatprep.mubr.f32.mxu0 %v694
    %1039 = vmatmul.mubr.f32.gmra.mxu0 %v693
    %v1040 = vpop.f32.mrf.mxu0
    %v1041 = vadd.f32 %v961, %v1040
    %v1042 = vpop.f32.mrf.mxu0
    %v1043 = vadd.f32 %v965, %v1042
    %1044 = vdwg.mxu0
    %1045 = vmatprep.subr.mxu0 %v796
    %1046 = vmatpush1.msra.mxu0 %v795
    %1047 = vmatprep.subr.mxu0 %v794
    %1048 = vmatpush1.msra.mxu0 %v793
    %1049 = vmatprep.subr.mxu0 %v792
    %1050 = vmatpush1.msra.mxu0 %v791
    %1051 = vmatprep.subr.mxu0 %v790
    %1052 = vmatpush1.msra.mxu0 %v789
    %1053 = vmatprep.subr.mxu0 %v788
    %1054 = vmatpush1.msra.mxu0 %v787
    %1055 = vmatprep.subr.mxu0 %v786
    %1056 = vmatpush1.msra.mxu0 %v785
    %1057 = vmatprep.subr.mxu0 %v784
    %1058 = vmatpush1.msra.mxu0 %v783
    %1059 = vmatprep.subr.mxu0 %v782
    %1060 = vmatpush1.msra.mxu0 %v781
    %1061 = vmatprep.subr.mxu0 %v780
    %1062 = vmatpush1.msra.mxu0 %v779
    %1063 = vmatprep.subr.mxu0 %v778
    %1064 = vmatpush1.msra.mxu0 %v777
    %1065 = vmatprep.subr.mxu0 %v776
    %1066 = vmatpush1.msra.mxu0 %v775
    %1067 = vmatprep.subr.mxu0 %v774
    %1068 = vmatpush1.msra.mxu0 %v773
    %1069 = vmatprep.subr.mxu0 %v772
    %1070 = vmatpush1.msra.mxu0 %v771
    %1071 = vmatprep.subr.mxu0 %v770
    %1072 = vmatpush1.msra.mxu0 %v769
    %1073 = vmatprep.subr.mxu0 %v768
    %1074 = vmatpush1.msra.mxu0 %v767
    %1075 = vmatprep.subr.mxu0 %v766
    %1076 = vmatpush1.msra.mxu0 %v765
    %1077 = vmatprep.subr.mxu0 %v828
    %1078 = vmatpush2.msra.mxu0 %v827
    %1079 = vmatprep.subr.mxu0 %v826
    %1080 = vmatpush2.msra.mxu0 %v825
    %1081 = vmatprep.subr.mxu0 %v824
    %1082 = vmatpush2.msra.mxu0 %v823
    %1083 = vmatprep.subr.mxu0 %v822
    %1084 = vmatpush2.msra.mxu0 %v821
    %1085 = vmatprep.subr.mxu0 %v820
    %1086 = vmatpush2.msra.mxu0 %v819
    %1087 = vmatprep.subr.mxu0 %v818
    %1088 = vmatpush2.msra.mxu0 %v817
    %1089 = vmatprep.subr.mxu0 %v816
    %1090 = vmatpush2.msra.mxu0 %v815
    %1091 = vmatprep.subr.mxu0 %v814
    %1092 = vmatpush2.msra.mxu0 %v813
    %1093 = vmatprep.subr.mxu0 %v812
    %1094 = vmatpush2.msra.mxu0 %v811
    %1095 = vmatprep.subr.mxu0 %v810
    %1096 = vmatpush2.msra.mxu0 %v809
    %1097 = vmatprep.subr.mxu0 %v808
    %1098 = vmatpush2.msra.mxu0 %v807
    %1099 = vmatprep.subr.mxu0 %v806
    %1100 = vmatpush2.msra.mxu0 %v805
    %1101 = vmatprep.subr.mxu0 %v804
    %1102 = vmatpush2.msra.mxu0 %v803
    %1103 = vmatprep.subr.mxu0 %v802
    %1104 = vmatpush2.msra.mxu0 %v801
    %1105 = vmatprep.subr.mxu0 %v800
    %1106 = vmatpush2.msra.mxu0 %v799
    %1107 = vmatprep.subr.mxu0 %v798
    %1108 = vmatpush2.msra.mxu0 %v797
    %1109 = vmatprep.mubr.f32.mxu0 %v688
    %1110 = vmatmul.mubr.f32.gmra.mxu0 %v687
    %v1111 = vpop.f32.mrf.mxu0
    %v1112 = vadd.f32 %v1035, %v1111
    %v1113 = vpop.f32.mrf.mxu0
    %v1114 = vadd.f32 %v1037, %v1113
    %1115 = vmatprep.mubr.f32.mxu0 %v696
    %1116 = vmatmul.mubr.f32.gmra.mxu0 %v695
    %v1117 = vpop.f32.mrf.mxu0
    %v1118 = vadd.f32 %v1041, %v1117
    %v1119 = vpop.f32.mrf.mxu0
    %v1120 = vadd.f32 %v1043, %v1119
    %1121 = vdwg.mxu0
    %1122 = vmatprep.subr.mxu0 %v860
    %1123 = vmatpush1.msra.mxu0 %v859
    %1124 = vmatprep.subr.mxu0 %v858
    %1125 = vmatpush1.msra.mxu0 %v857
    %1126 = vmatprep.subr.mxu0 %v856
    %1127 = vmatpush1.msra.mxu0 %v855
    %1128 = vmatprep.subr.mxu0 %v854
    %1129 = vmatpush1.msra.mxu0 %v853
    %1130 = vmatprep.subr.mxu0 %v852
    %1131 = vmatpush1.msra.mxu0 %v851
    %1132 = vmatprep.subr.mxu0 %v850
    %1133 = vmatpush1.msra.mxu0 %v849
    %1134 = vmatprep.subr.mxu0 %v848
    %1135 = vmatpush1.msra.mxu0 %v847
    %1136 = vmatprep.subr.mxu0 %v846
    %1137 = vmatpush1.msra.mxu0 %v845
    %1138 = vmatprep.subr.mxu0 %v844
    %1139 = vmatpush1.msra.mxu0 %v843
    %1140 = vmatprep.subr.mxu0 %v842
    %1141 = vmatpush1.msra.mxu0 %v841
    %1142 = vmatprep.subr.mxu0 %v840
    %1143 = vmatpush1.msra.mxu0 %v839
    %1144 = vmatprep.subr.mxu0 %v838
    %1145 = vmatpush1.msra.mxu0 %v837
    %1146 = vmatprep.subr.mxu0 %v836
    %1147 = vmatpush1.msra.mxu0 %v835
    %1148 = vmatprep.subr.mxu0 %v834
    %1149 = vmatpush1.msra.mxu0 %v833
    %1150 = vmatprep.subr.mxu0 %v832
    %1151 = vmatpush1.msra.mxu0 %v831
    %1152 = vmatprep.subr.mxu0 %v830
    %1153 = vmatpush1.msra.mxu0 %v829
    %1154 = vmatprep.subr.mxu0 %v892
    %1155 = vmatpush2.msra.mxu0 %v891
    %1156 = vmatprep.subr.mxu0 %v890
    %1157 = vmatpush2.msra.mxu0 %v889
    %1158 = vmatprep.subr.mxu0 %v888
    %1159 = vmatpush2.msra.mxu0 %v887
    %1160 = vmatprep.subr.mxu0 %v886
    %1161 = vmatpush2.msra.mxu0 %v885
    %1162 = vmatprep.subr.mxu0 %v884
    %1163 = vmatpush2.msra.mxu0 %v883
    %1164 = vmatprep.subr.mxu0 %v882
    %1165 = vmatpush2.msra.mxu0 %v881
    %1166 = vmatprep.subr.mxu0 %v880
    %1167 = vmatpush2.msra.mxu0 %v879
    %1168 = vmatprep.subr.mxu0 %v878
    %1169 = vmatpush2.msra.mxu0 %v877
    %1170 = vmatprep.subr.mxu0 %v876
    %1171 = vmatpush2.msra.mxu0 %v875
    %1172 = vmatprep.subr.mxu0 %v874
    %1173 = vmatpush2.msra.mxu0 %v873
    %1174 = vmatprep.subr.mxu0 %v872
    %1175 = vmatpush2.msra.mxu0 %v871
    %1176 = vmatprep.subr.mxu0 %v870
    %1177 = vmatpush2.msra.mxu0 %v869
    %1178 = vmatprep.subr.mxu0 %v868
    %1179 = vmatpush2.msra.mxu0 %v867
    %1180 = vmatprep.subr.mxu0 %v866
    %1181 = vmatpush2.msra.mxu0 %v865
    %1182 = vmatprep.subr.mxu0 %v864
    %1183 = vmatpush2.msra.mxu0 %v863
    %1184 = vmatprep.subr.mxu0 %v862
    %1185 = vmatpush2.msra.mxu0 %v861
    %1186 = vmatprep.mubr.f32.mxu0 %v690
    %1187 = vmatmul.mubr.f32.gmra.mxu0 %v689
    %v1188 = vpop.f32.mrf.mxu0
    %v1189 = vadd.f32 %v1112, %v1188
    %v1190 = vpop.f32.mrf.mxu0
    %v1191 = vadd.f32 %v1114, %v1190
    %1192 = vmatprep.mubr.f32.mxu0 %v698
    %1193 = vmatmul.mubr.f32.gmra.mxu0 %v697
    %v1194 = vpop.f32.mrf.mxu0
    %v1195 = vadd.f32 %v1118, %v1194
    %v1196 = vpop.f32.mrf.mxu0
    %v1197 = vadd.f32 %v1120, %v1196
    %1198 = vdwg.mxu0
    %1199 = vmatprep.subr.mxu0 %v924
    %1200 = vmatpush1.msra.mxu0 %v923
    %1201 = vmatprep.subr.mxu0 %v922
    %1202 = vmatpush1.msra.mxu0 %v921
    %1203 = vmatprep.subr.mxu0 %v920
    %1204 = vmatpush1.msra.mxu0 %v919
    %1205 = vmatprep.subr.mxu0 %v918
    %1206 = vmatpush1.msra.mxu0 %v917
    %1207 = vmatprep.subr.mxu0 %v916
    %1208 = vmatpush1.msra.mxu0 %v915
    %1209 = vmatprep.subr.mxu0 %v914
    %1210 = vmatpush1.msra.mxu0 %v913
    %1211 = vmatprep.subr.mxu0 %v912
    %1212 = vmatpush1.msra.mxu0 %v911
    %1213 = vmatprep.subr.mxu0 %v910
    %1214 = vmatpush1.msra.mxu0 %v909
    %1215 = vmatprep.subr.mxu0 %v908
    %1216 = vmatpush1.msra.mxu0 %v907
    %1217 = vmatprep.subr.mxu0 %v906
    %1218 = vmatpush1.msra.mxu0 %v905
    %1219 = vmatprep.subr.mxu0 %v904
    %1220 = vmatpush1.msra.mxu0 %v903
    %1221 = vmatprep.subr.mxu0 %v902
    %1222 = vmatpush1.msra.mxu0 %v901
    %1223 = vmatprep.subr.mxu0 %v900
    %1224 = vmatpush1.msra.mxu0 %v899
    %1225 = vmatprep.subr.mxu0 %v898
    %1226 = vmatpush1.msra.mxu0 %v897
    %1227 = vmatprep.subr.mxu0 %v896
    %1228 = vmatpush1.msra.mxu0 %v895
    %1229 = vmatprep.subr.mxu0 %v894
    %1230 = vmatpush1.msra.mxu0 %v893
    %1231 = vmatprep.subr.mxu0 %v956
    %1232 = vmatpush2.msra.mxu0 %v955
    %1233 = vmatprep.subr.mxu0 %v954
    %1234 = vmatpush2.msra.mxu0 %v953
    %1235 = vmatprep.subr.mxu0 %v952
    %1236 = vmatpush2.msra.mxu0 %v951
    %1237 = vmatprep.subr.mxu0 %v950
    %1238 = vmatpush2.msra.mxu0 %v949
    %1239 = vmatprep.subr.mxu0 %v948
    %1240 = vmatpush2.msra.mxu0 %v947
    %1241 = vmatprep.subr.mxu0 %v946
    %1242 = vmatpush2.msra.mxu0 %v945
    %1243 = vmatprep.subr.mxu0 %v944
    %1244 = vmatpush2.msra.mxu0 %v943
    %1245 = vmatprep.subr.mxu0 %v942
    %1246 = vmatpush2.msra.mxu0 %v941
    %1247 = vmatprep.subr.mxu0 %v940
    %1248 = vmatpush2.msra.mxu0 %v939
    %1249 = vmatprep.subr.mxu0 %v938
    %1250 = vmatpush2.msra.mxu0 %v937
    %1251 = vmatprep.subr.mxu0 %v936
    %1252 = vmatpush2.msra.mxu0 %v935
    %1253 = vmatprep.subr.mxu0 %v934
    %1254 = vmatpush2.msra.mxu0 %v933
    %1255 = vmatprep.subr.mxu0 %v932
    %1256 = vmatpush2.msra.mxu0 %v931
    %1257 = vmatprep.subr.mxu0 %v930
    %1258 = vmatpush2.msra.mxu0 %v929
    %1259 = vmatprep.subr.mxu0 %v928
    %1260 = vmatpush2.msra.mxu0 %v927
    %1261 = vmatprep.subr.mxu0 %v926
    %1262 = vmatpush2.msra.mxu0 %v925
    %1263 = vmatprep.mubr.f32.mxu0 %v692
    %1264 = vmatmul.mubr.f32.gmra.mxu0 %v691
    %v1265 = vpop.f32.mrf.mxu0
    %v1266 = vadd.f32 %v1189, %v1265
    %v1267 = vpop.f32.mrf.mxu0
    %v1268 = vadd.f32 %v1191, %v1267
    %1269 = vmatprep.mubr.f32.mxu0 %v700
    %1270 = vmatmul.mubr.f32.gmra.mxu0 %v699
    %v1271 = vpop.f32.mrf.mxu0
    %v1272 = vadd.f32 %v1195, %v1271
    %v1273 = vpop.f32.mrf.mxu0
    %v1274 = vadd.f32 %v1197, %v1273
    %1275 = vdwg.mxu0
    %1276 = vst [vmem:[#allocation10] sm:$0xff] %v1266
    %1277 = vst [vmem:[#allocation10 + $0x8] sm:$0xff] %v1268
    %1278 = vst [vmem:[#allocation10 + $0x10] sm:$0xff] %v1272
    %1279 = vst [vmem:[#allocation10 + $0x18] sm:$0xff] %v1274
    // Predicated region
    $region38: #{tpu_custom_call.1} parent=1 // pred_check
      _
    $region39: #{tpu_custom_call.1} parent=1 // pred_check_branch
      %1281 = sbr.rel (0) target = $region41
    $region40: #{tpu_custom_call.1} parent=1 // pred_region
      %s1283 = ssub.s32 512, 512
      %1284 = vsyncadd [#allocation4], %s1283
      %s1285 = sshll.u32 [#allocation10], 4
      %s1286 = int_to_ptr.vmem [resolvable:$true] %s1285
      %1291 = dma.vmem_to_hbm [thread:$0]  %s1286, 512, %s5, [#allocation4], 256, 256, 16
    $region41: #{tpu_custom_call.1} parent=1 // pred_fallthru
      _
    // Predicated region
    $region42: #{tpu_custom_call.1} parent=1 // pred_check
      _
    $region43: #{tpu_custom_call.1} parent=1 // pred_check_branch
      %1293 = sbr.rel (0) target = $region45
    $region44: #{tpu_custom_call.1} parent=1 // pred_region
      %1294 = dma.done [#allocation4], 512
    $region45: #{tpu_custom_call.1} parent=1 // pred_fallthru
      _
    %1295 = vsyncpa [#allocation3], 1
    %1296 = vsyncpa [#allocation6], 1
    %1297 = vsyncpa [#allocation9], 1
    %1298 = vsyncpa [#allocation4], 1

</llo_original>
